<compile_context>
chip_gen: v7x
topology: tpu7x:2x2x1
jax: 0.10.0
libtpu: 0.0.40
codegen_flags: <defaults>
</compile_context>

<pallas_src>
import functools

import jax
import jax.numpy as jnp
from jax.experimental import pallas as pl
from jax.experimental.pallas import tpu as pltpu


# ----------------------------------------------------------------------------
# Kernel: full transformer block for `block_b` batch elements per grid step.
# ----------------------------------------------------------------------------
def transformer_kernel(
    x_ref,             # (Bb, S, F)    f32 activations
    g1_ref, b1_ref,    # layernorm 1 gamma/beta            (1, F)       f32
    wqkv_ref,          # fused QKV weight [Q|K|V]          (F, 3*H*D)   bf16
    bqkv_ref,          # fused QKV bias                    (1, 3*H*D)   f32
    wo_ref,            # output projection weight          (H*D, F)     bf16
    bo_ref,            # output projection bias            (1, F)       f32
    g2_ref, b2_ref,    # layernorm 2 gamma/beta            (1, F)       f32
    w1_ref, bb1_ref,   # FF linear1                        (F, M) bf16, (1, M) f32
    w2_ref, bb2_ref,   # FF linear2                        (M, F) bf16, (1, F) f32
    o_ref,             # (Bb, S, F)    f32
    *, heads, d_head, eps, scale,
):
    Bb, S, F = x_ref.shape
    H, D = heads, d_head
    HD = H * D
    cdt = wqkv_ref.dtype            # bf16 compute dtype for MXU operands

    x = x_ref[...]                  # (Bb, S, F) f32

    def layernorm(v, gamma, beta):
        mean = jnp.mean(v, axis=-1, keepdims=True)
        var = jnp.mean((v - mean) ** 2, axis=-1, keepdims=True)
        return (v - mean) * jax.lax.rsqrt(var + eps) * gamma + beta

    # ---- attention sub-block (pre-norm) -------------------------------------
    xn = layernorm(x, g1_ref[...], b1_ref[...])                        # f32

    # Single lane-dense QKV projection: (Bb*S, F) @ (F, 3*H*D), f32 accumulate.
    xn2d = xn.reshape(Bb * S, F).astype(cdt)
    qkv = jnp.dot(xn2d, wqkv_ref[...],
                  preferred_element_type=jnp.float32) + bqkv_ref[...]  # (Bb*S, 3HD) f32
    qkv = qkv.reshape(Bb, S, 3 * HD)

    # Attention scale applied in f32 to Q only (one small VPU mul).
    q = (qkv[:, :, 0 * HD:1 * HD] * scale).astype(cdt)                 # (Bb, S, HD)
    k = qkv[:, :, 1 * HD:2 * HD].astype(cdt)
    v = qkv[:, :, 2 * HD:3 * HD].astype(cdt)

    # Heads only appear in the S x S einsums (batched over Bb); H is small so
    # the unrolled loop keeps only one (Bb, S, S) score tensor live at a time.
    # TODO(synk): for large S, tile this loop over the KV axis (online softmax).
    head_ctx = []
    for h in range(H):
        sl = slice(h * D, (h + 1) * D)
        q_h, k_h, v_h = q[:, :, sl], k[:, :, sl], v[:, :, sl]          # (Bb, S, D)
        s = jnp.einsum('bqd,bkd->bqk', q_h, k_h,
                       preferred_element_type=jnp.float32)             # (Bb, S, S) f32
        s = s - jnp.max(s, axis=-1, keepdims=True)
        p = jnp.exp(s)
        p = p * pl.reciprocal(jnp.sum(p, axis=-1, keepdims=True), approx=True)
        a_h = jnp.einsum('bqk,bkd->bqd', p.astype(cdt), v_h,
                         preferred_element_type=jnp.float32)           # (Bb, S, D) f32
        head_ctx.append(a_h.astype(cdt))

    attn = jnp.concatenate(head_ctx, axis=-1)                          # (Bb, S, HD) bf16

    # Single output projection, contracting over all heads at once (K = H*D).
    proj = jnp.dot(attn.reshape(Bb * S, HD), wo_ref[...],
                   preferred_element_type=jnp.float32) + bo_ref[...]   # (Bb*S, F) f32
    x1 = proj.reshape(Bb, S, F) + x                                    # residual

    # ---- feed-forward sub-block (pre-norm) -----------------------------------
    xn2 = layernorm(x1, g2_ref[...], b2_ref[...])
    xf = xn2.reshape(Bb * S, F).astype(cdt)
    h1 = jnp.dot(xf, w1_ref[...], preferred_element_type=jnp.float32) + bb1_ref[...]
    h1 = jnp.maximum(h1, 0.0)
    # TODO(synk): dropout omitted (eval-mode identity).
    h2 = jnp.dot(h1.astype(cdt), w2_ref[...],
                 preferred_element_type=jnp.float32) + bb2_ref[...]

    o_ref[...] = h2.reshape(Bb, S, F) + x1


# ----------------------------------------------------------------------------
# VMEM footprint estimate (bytes) for vmem_limit_bytes sizing.
# ----------------------------------------------------------------------------
def _vmem_bytes_estimate(block_b, S, F, HD, M, w_bytes=2):
    f32 = 4
    io_blocks = 2 * 2 * (block_b * S * F * f32)              # x + out, double-buffered
    weights = (F * 3 * HD + HD * F + F * M + M * F) * w_bytes
    small = (3 * HD + M + 8 * F) * f32                       # biases + layernorm params
    weights_total = 2 * (weights + small)                     # assume pipeline buffers x2
    inter = (block_b * S * 3 * HD                             # qkv
             + block_b * S * S                                # one head's scores
             + block_b * S * M                                # FF hidden
             + 4 * block_b * S * F) * f32                     # xn / x1 / proj / h2
    return io_blocks + weights_total + inter


# ----------------------------------------------------------------------------
# Wrapper: host-side weight packing + pallas_call
# ----------------------------------------------------------------------------
def transformer_forward(x, params, *, heads, d_head, eps=1e-6, block_b=1,
                        compute_dtype=jnp.bfloat16):
    B, S, F = x.shape
    assert B % block_b == 0, "block_b must divide batch"
    H, D = heads, d_head
    HD = H * D
    M = params["w1"].shape[1]
    scale = float(1.0 / (D ** 0.5))

    # --- pack weights once on the host (outside the kernel) ------------------
    # PyTorch head layout: output column index = h*D + d, so a plain concat of
    # the three projection weights gives the [Q_allheads | K | V] packing the
    # kernel slices per head.
    wqkv = jnp.concatenate(
        [params["wq"], params["wk"], params["wv"]], axis=-1).astype(compute_dtype)  # (F, 3HD)
    bqkv = jnp.concatenate(
        [params["bq"], params["bk"], params["bv"]], axis=-1).astype(jnp.float32)    # (1, 3HD)

    param_list = [
        params["ln1_g"].astype(jnp.float32), params["ln1_b"].astype(jnp.float32),
        wqkv, bqkv,
        params["wo"].astype(compute_dtype), params["bo"].astype(jnp.float32),
        params["ln2_g"].astype(jnp.float32), params["ln2_b"].astype(jnp.float32),
        params["w1"].astype(compute_dtype), params["b1"].astype(jnp.float32),
        params["w2"].astype(compute_dtype), params["b2"].astype(jnp.float32),
    ]

    def full_spec(arr):
        # Constant index_map -> same block every step; weight stays VMEM-resident.
        nd = arr.ndim
        return pl.BlockSpec(arr.shape, lambda b, nd=nd: (0,) * nd)

    in_specs = [pl.BlockSpec((block_b, S, F), lambda b: (b, 0, 0))]
    in_specs += [full_spec(p) for p in param_list]

    # Explicit VMEM accounting, capped at 64 MiB so the same sizing is valid
    # on v7x (64 MiB physical VMEM) as well as v5e/v6e (128 MiB).
    est = _vmem_bytes_estimate(block_b, S, F, HD, M)
    vmem_limit = int(min(max(1.5 * est, 32 * 2**20), 64 * 2**20))

    kernel = functools.partial(transformer_kernel, heads=H, d_head=D, eps=eps,
                               scale=scale)

    # grid=(B//block_b,) is marked "parallel"; keep it even (>=2) when possible
    # so the two TensorCores of a v7x megacore split it evenly.
    return pl.pallas_call(
        kernel,
        out_shape=jax.ShapeDtypeStruct((B, S, F), jnp.float32),
        grid=(B // block_b,),
        in_specs=in_specs,
        out_specs=pl.BlockSpec((block_b, S, F), lambda b: (b, 0, 0)),
        compiler_params=pltpu.CompilerParams(
            dimension_semantics=("parallel",),
            vmem_limit_bytes=vmem_limit,
        ),
    )(x, *param_list)


# ----------------------------------------------------------------------------
# Pure-JAX reference (mirrors the PyTorch forward exactly, eval mode, f32)
# ----------------------------------------------------------------------------
def transformer_ref(x, params, *, heads, d_head, eps=1e-6):
    def ln(v, g, b):
        m = jnp.mean(v, axis=-1, keepdims=True)
        var = jnp.mean((v - m) ** 2, axis=-1, keepdims=True)
        return (v - m) / jnp.sqrt(var + eps) * g + b

    B, S, F = x.shape
    res = x
    xn = ln(x, params["ln1_g"], params["ln1_b"])
    v = xn @ params["wv"] + params["bv"]
    k = xn @ params["wk"] + params["bk"]
    q = xn @ params["wq"] + params["bq"]
    v = v.reshape(B, S, heads, d_head).transpose(0, 2, 1, 3)
    k = k.reshape(B, S, heads, d_head).transpose(0, 2, 1, 3)
    q = q.reshape(B, S, heads, d_head).transpose(0, 2, 1, 3)
    s = jnp.einsum("bhqd,bhkd->bhqk", q, k) / jnp.sqrt(jnp.float32(d_head))
    p = jax.nn.softmax(s, axis=-1)
    a = jnp.einsum("bhqk,bhkd->bhqd", p, v)
    a = a.transpose(0, 2, 1, 3).reshape(B, S, heads * d_head)
    a = a @ params["wo"] + params["bo"]
    x1 = a + res
    res = x1
    xn2 = ln(x1, params["ln2_g"], params["ln2_b"])
    h = jnp.maximum(xn2 @ params["w1"] + params["b1"], 0.0)
    return h @ params["w2"] + params["b2"] + res


# ----------------------------------------------------------------------------
# Deterministic parameter init + demo
# ----------------------------------------------------------------------------
def init_params(key, F_in, F_o, mlp_dim, heads):
    ks = jax.random.split(key, 12)

    def w(k, shape):
        return jax.random.normal(k, shape, jnp.float32) * 0.05

    return {
        "ln1_g": jnp.ones((1, F_in), jnp.float32),
        "ln1_b": jnp.zeros((1, F_in), jnp.float32),
        "wv": w(ks[0], (F_in, heads * F_o)),
        "bv": w(ks[1], (1, heads * F_o)),
        "wk": w(ks[2], (F_in, heads * F_o)),
        "bk": w(ks[3], (1, heads * F_o)),
        "wq": w(ks[4], (F_in, heads * F_o)),
        "bq": w(ks[5], (1, heads * F_o)),
        "wo": w(ks[6], (heads * F_o, F_in)),
        "bo": w(ks[7], (1, F_in)),
        "ln2_g": jnp.ones((1, F_in), jnp.float32),
        "ln2_b": jnp.zeros((1, F_in), jnp.float32),
        "w1": w(ks[8], (F_in, mlp_dim)),
        "b1": w(ks[9], (1, mlp_dim)),
        "w2": w(ks[10], (mlp_dim, F_in)),
        "b2": w(ks[11], (1, F_in)),
    }


if __name__ == "__main__":
    B, S = 2, 8
    F_in, F_o, mlp_dim, heads = 32, 16, 64, 4

    key = jax.random.PRNGKey(0)
    kx, kp = jax.random.split(key)
    x = jax.random.normal(kx, (B, S, F_in), jnp.float32)
    params = init_params(kp, F_in, F_o, mlp_dim, heads)

    # block_b=1 -> grid=(2,): even-length parallel axis (both v7x TCs busy);
    # larger batches should raise block_b to amortize per-step overhead.
    out = transformer_forward(x, params, heads=heads, d_head=F_o, block_b=1)
    out = jax.block_until_ready(out)

    ref = transformer_ref(x, params, heads=heads, d_head=F_o)
    assert out.shape == (B, S, F_in)
    # bf16 MXU operands + approx-reciprocal softmax => not bit-faithful to the
    # f32 PyTorch forward; 2e-2 tolerance documents that.
    assert jnp.allclose(out, ref, rtol=2e-2, atol=2e-2), "mismatch vs reference"

    print("KERNEL_OK")
</pallas_src>

<mosaic_0001>
module attributes {stable_mosaic.version = 11 : i64} {
  func.func @transformer_kernel(%arg0: i32, %arg1: memref<1x8x32xf32, #tpu.memory_space<vmem>>, %arg2: memref<1x32xf32, #tpu.memory_space<vmem>>, %arg3: memref<1x32xf32, #tpu.memory_space<vmem>>, %arg4: memref<32x192xbf16, #tpu.memory_space<vmem>>, %arg5: memref<1x192xf32, #tpu.memory_space<vmem>>, %arg6: memref<64x32xbf16, #tpu.memory_space<vmem>>, %arg7: memref<1x32xf32, #tpu.memory_space<vmem>>, %arg8: memref<1x32xf32, #tpu.memory_space<vmem>>, %arg9: memref<1x32xf32, #tpu.memory_space<vmem>>, %arg10: memref<32x64xbf16, #tpu.memory_space<vmem>>, %arg11: memref<1x64xf32, #tpu.memory_space<vmem>>, %arg12: memref<64x32xbf16, #tpu.memory_space<vmem>>, %arg13: memref<1x32xf32, #tpu.memory_space<vmem>>, %arg14: memref<1x8x32xf32, #tpu.memory_space<vmem>>) attributes {dimension_semantics = [#tpu.dimension_semantics<parallel>], iteration_bounds = array<i64: 2>, scalar_prefetch = 0 : i64, scratch_operands = 0 : i64, tpu.core_type = #tpu.core_type<tc>, window_params = [{transform_indices = @transform_0, window_bounds = array<i64: 1, 8, 32>}, {pipeline_mode = #tpu.pipeline_mode<synchronous>, transform_indices = @transform_1, window_bounds = array<i64: 1, 32>}, {pipeline_mode = #tpu.pipeline_mode<synchronous>, transform_indices = @transform_2, window_bounds = array<i64: 1, 32>}, {pipeline_mode = #tpu.pipeline_mode<synchronous>, transform_indices = @transform_3, window_bounds = array<i64: 32, 192>}, {pipeline_mode = #tpu.pipeline_mode<synchronous>, transform_indices = @transform_4, window_bounds = array<i64: 1, 192>}, {pipeline_mode = #tpu.pipeline_mode<synchronous>, transform_indices = @transform_5, window_bounds = array<i64: 64, 32>}, {pipeline_mode = #tpu.pipeline_mode<synchronous>, transform_indices = @transform_6, window_bounds = array<i64: 1, 32>}, {pipeline_mode = #tpu.pipeline_mode<synchronous>, transform_indices = @transform_7, window_bounds = array<i64: 1, 32>}, {pipeline_mode = #tpu.pipeline_mode<synchronous>, transform_indices = @transform_8, window_bounds = array<i64: 1, 32>}, {pipeline_mode = #tpu.pipeline_mode<synchronous>, transform_indices = @transform_9, window_bounds = array<i64: 32, 64>}, {pipeline_mode = #tpu.pipeline_mode<synchronous>, transform_indices = @transform_10, window_bounds = array<i64: 1, 64>}, {pipeline_mode = #tpu.pipeline_mode<synchronous>, transform_indices = @transform_11, window_bounds = array<i64: 64, 32>}, {pipeline_mode = #tpu.pipeline_mode<synchronous>, transform_indices = @transform_12, window_bounds = array<i64: 1, 32>}, {transform_indices = @transform_13, window_bounds = array<i64: 1, 8, 32>}]} {
    %c0 = arith.constant 0 : index
    %c0_0 = arith.constant 0 : index
    %c0_1 = arith.constant 0 : index
    %0 = vector.load %arg1[%c0, %c0_0, %c0_1] : memref<1x8x32xf32, #tpu.memory_space<vmem>>, vector<1x8x32xf32>
    %c0_2 = arith.constant 0 : index
    %c0_3 = arith.constant 0 : index
    %1 = vector.load %arg2[%c0_2, %c0_3] : memref<1x32xf32, #tpu.memory_space<vmem>>, vector<1x32xf32>
    %c0_4 = arith.constant 0 : index
    %c0_5 = arith.constant 0 : index
    %2 = vector.load %arg3[%c0_4, %c0_5] : memref<1x32xf32, #tpu.memory_space<vmem>>, vector<1x32xf32>
    %cst = arith.constant dense<0.000000e+00> : vector<1x8xf32>
    %3 = vector.multi_reduction <add>, %0, %cst [2] : vector<1x8x32xf32> to vector<1x8xf32>
    %4 = vector.shape_cast %3 : vector<1x8xf32> to vector<1x8x1xf32>
    %cst_6 = arith.constant 3.200000e+01 : f32
    %5 = vector.broadcast %cst_6 : f32 to vector<1x8x1xf32>
    %6 = arith.divf %4, %5 : vector<1x8x1xf32>
    %7 = vector.broadcast %6 : vector<1x8x1xf32> to vector<1x8x32xf32>
    %8 = arith.subf %0, %7 : vector<1x8x32xf32>
    %9 = arith.mulf %8, %8 : vector<1x8x32xf32>
    %cst_7 = arith.constant dense<0.000000e+00> : vector<1x8xf32>
    %10 = vector.multi_reduction <add>, %9, %cst_7 [2] : vector<1x8x32xf32> to vector<1x8xf32>
    %11 = vector.shape_cast %10 : vector<1x8xf32> to vector<1x8x1xf32>
    %cst_8 = arith.constant 3.200000e+01 : f32
    %12 = vector.broadcast %cst_8 : f32 to vector<1x8x1xf32>
    %13 = arith.divf %11, %12 : vector<1x8x1xf32>
    %14 = vector.broadcast %6 : vector<1x8x1xf32> to vector<1x8x32xf32>
    %15 = arith.subf %0, %14 : vector<1x8x32xf32>
    %cst_9 = arith.constant 9.99999997E-7 : f32
    %16 = vector.broadcast %cst_9 : f32 to vector<1x8x1xf32>
    %17 = arith.addf %13, %16 : vector<1x8x1xf32>
    %18 = math.rsqrt %17 : vector<1x8x1xf32>
    %19 = vector.broadcast %18 : vector<1x8x1xf32> to vector<1x8x32xf32>
    %20 = arith.mulf %15, %19 : vector<1x8x32xf32>
    %21 = vector.shape_cast %1 : vector<1x32xf32> to vector<1x1x32xf32>
    %22 = vector.broadcast %21 : vector<1x1x32xf32> to vector<1x8x32xf32>
    %23 = arith.mulf %20, %22 : vector<1x8x32xf32>
    %24 = vector.shape_cast %2 : vector<1x32xf32> to vector<1x1x32xf32>
    %25 = vector.broadcast %24 : vector<1x1x32xf32> to vector<1x8x32xf32>
    %26 = arith.addf %23, %25 : vector<1x8x32xf32>
    %27 = vector.shape_cast %26 : vector<1x8x32xf32> to vector<8x32xf32>
    %28 = arith.truncf %27 : vector<8x32xf32> to vector<8x32xbf16>
    %c0_10 = arith.constant 0 : index
    %c0_11 = arith.constant 0 : index
    %29 = vector.load %arg4[%c0_10, %c0_11] : memref<32x192xbf16, #tpu.memory_space<vmem>>, vector<32x192xbf16>
    %cst_12 = arith.constant dense<0.000000e+00> : vector<8x192xf32>
    %30 = tpu.matmul %28, %29, %cst_12 {dimension_numbers = #tpu.dot_dimension_numbers<[1], [0], [0], [1], [0, 0, 1, 1], [], []>} : vector<8x32xbf16>, vector<32x192xbf16>, vector<8x192xf32> -> vector<8x192xf32>
    %c0_13 = arith.constant 0 : index
    %c0_14 = arith.constant 0 : index
    %31 = vector.load %arg5[%c0_13, %c0_14] : memref<1x192xf32, #tpu.memory_space<vmem>>, vector<1x192xf32>
    %32 = vector.broadcast %31 : vector<1x192xf32> to vector<8x192xf32>
    %33 = arith.addf %30, %32 : vector<8x192xf32>
    %34 = vector.shape_cast %33 : vector<8x192xf32> to vector<1x8x192xf32>
    %35 = vector.extract_strided_slice %34 {offsets = [0, 0, 0], sizes = [1, 8, 64], strides = [1, 1, 1]} : vector<1x8x192xf32> to vector<1x8x64xf32>
    %cst_15 = arith.constant 2.500000e-01 : f32
    %36 = vector.broadcast %cst_15 : f32 to vector<1x8x64xf32>
    %37 = arith.mulf %35, %36 : vector<1x8x64xf32>
    %38 = arith.truncf %37 : vector<1x8x64xf32> to vector<1x8x64xbf16>
    %39 = vector.extract_strided_slice %34 {offsets = [0, 0, 64], sizes = [1, 8, 64], strides = [1, 1, 1]} : vector<1x8x192xf32> to vector<1x8x64xf32>
    %40 = arith.truncf %39 : vector<1x8x64xf32> to vector<1x8x64xbf16>
    %41 = vector.extract_strided_slice %34 {offsets = [0, 0, 128], sizes = [1, 8, 64], strides = [1, 1, 1]} : vector<1x8x192xf32> to vector<1x8x64xf32>
    %42 = arith.truncf %41 : vector<1x8x64xf32> to vector<1x8x64xbf16>
    %43 = vector.extract_strided_slice %38 {offsets = [0, 0, 0], sizes = [1, 8, 16], strides = [1, 1, 1]} : vector<1x8x64xbf16> to vector<1x8x16xbf16>
    %44 = vector.extract_strided_slice %40 {offsets = [0, 0, 0], sizes = [1, 8, 16], strides = [1, 1, 1]} : vector<1x8x64xbf16> to vector<1x8x16xbf16>
    %45 = vector.extract_strided_slice %42 {offsets = [0, 0, 0], sizes = [1, 8, 16], strides = [1, 1, 1]} : vector<1x8x64xbf16> to vector<1x8x16xbf16>
    "tpu.trace_start"() <{level = 10 : i32, message = "bqd,bkd->bqk"}> : () -> ()
    %cst_16 = arith.constant dense<0.000000e+00> : vector<1x8x8xf32>
    %46 = tpu.matmul %43, %44, %cst_16 {dimension_numbers = #tpu.dot_dimension_numbers<[2], [2], [1], [1], [0, 0, 0, 1, 1, 1], [0], [0]>} : vector<1x8x16xbf16>, vector<1x8x16xbf16>, vector<1x8x8xf32> -> vector<1x8x8xf32>
    "tpu.trace_stop"() : () -> ()
    %cst_17 = arith.constant dense<0xFF800000> : vector<1x8xf32>
    %47 = vector.multi_reduction <maximumf>, %46, %cst_17 [2] : vector<1x8x8xf32> to vector<1x8xf32>
    %48 = vector.shape_cast %47 : vector<1x8xf32> to vector<1x8x1xf32>
    %49 = vector.broadcast %48 : vector<1x8x1xf32> to vector<1x8x8xf32>
    %50 = arith.subf %46, %49 : vector<1x8x8xf32>
    %51 = math.exp %50 : vector<1x8x8xf32>
    %cst_18 = arith.constant dense<0.000000e+00> : vector<1x8xf32>
    %52 = vector.multi_reduction <add>, %51, %cst_18 [2] : vector<1x8x8xf32> to vector<1x8xf32>
    %53 = vector.shape_cast %52 : vector<1x8xf32> to vector<1x8x1xf32>
    %54 = tpu.reciprocal %53 {approx = true} : vector<1x8x1xf32> -> vector<1x8x1xf32>
    %55 = vector.broadcast %54 : vector<1x8x1xf32> to vector<1x8x8xf32>
    %56 = arith.mulf %51, %55 : vector<1x8x8xf32>
    %57 = arith.truncf %56 : vector<1x8x8xf32> to vector<1x8x8xbf16>
    "tpu.trace_start"() <{level = 10 : i32, message = "bqk,bkd->bqd"}> : () -> ()
    %cst_19 = arith.constant dense<0.000000e+00> : vector<1x8x16xf32>
    %58 = tpu.matmul %57, %45, %cst_19 {dimension_numbers = #tpu.dot_dimension_numbers<[2], [1], [1], [2], [0, 0, 0, 1, 1, 2], [0], [0]>} : vector<1x8x8xbf16>, vector<1x8x16xbf16>, vector<1x8x16xf32> -> vector<1x8x16xf32>
    "tpu.trace_stop"() : () -> ()
    %59 = arith.truncf %58 : vector<1x8x16xf32> to vector<1x8x16xbf16>
    %60 = vector.extract_strided_slice %38 {offsets = [0, 0, 16], sizes = [1, 8, 16], strides = [1, 1, 1]} : vector<1x8x64xbf16> to vector<1x8x16xbf16>
    %61 = vector.extract_strided_slice %40 {offsets = [0, 0, 16], sizes = [1, 8, 16], strides = [1, 1, 1]} : vector<1x8x64xbf16> to vector<1x8x16xbf16>
    %62 = vector.extract_strided_slice %42 {offsets = [0, 0, 16], sizes = [1, 8, 16], strides = [1, 1, 1]} : vector<1x8x64xbf16> to vector<1x8x16xbf16>
    "tpu.trace_start"() <{level = 10 : i32, message = "bqd,bkd->bqk"}> : () -> ()
    %cst_20 = arith.constant dense<0.000000e+00> : vector<1x8x8xf32>
    %63 = tpu.matmul %60, %61, %cst_20 {dimension_numbers = #tpu.dot_dimension_numbers<[2], [2], [1], [1], [0, 0, 0, 1, 1, 1], [0], [0]>} : vector<1x8x16xbf16>, vector<1x8x16xbf16>, vector<1x8x8xf32> -> vector<1x8x8xf32>
    "tpu.trace_stop"() : () -> ()
    %cst_21 = arith.constant dense<0xFF800000> : vector<1x8xf32>
    %64 = vector.multi_reduction <maximumf>, %63, %cst_21 [2] : vector<1x8x8xf32> to vector<1x8xf32>
    %65 = vector.shape_cast %64 : vector<1x8xf32> to vector<1x8x1xf32>
    %66 = vector.broadcast %65 : vector<1x8x1xf32> to vector<1x8x8xf32>
    %67 = arith.subf %63, %66 : vector<1x8x8xf32>
    %68 = math.exp %67 : vector<1x8x8xf32>
    %cst_22 = arith.constant dense<0.000000e+00> : vector<1x8xf32>
    %69 = vector.multi_reduction <add>, %68, %cst_22 [2] : vector<1x8x8xf32> to vector<1x8xf32>
    %70 = vector.shape_cast %69 : vector<1x8xf32> to vector<1x8x1xf32>
    %71 = tpu.reciprocal %70 {approx = true} : vector<1x8x1xf32> -> vector<1x8x1xf32>
    %72 = vector.broadcast %71 : vector<1x8x1xf32> to vector<1x8x8xf32>
    %73 = arith.mulf %68, %72 : vector<1x8x8xf32>
    %74 = arith.truncf %73 : vector<1x8x8xf32> to vector<1x8x8xbf16>
    "tpu.trace_start"() <{level = 10 : i32, message = "bqk,bkd->bqd"}> : () -> ()
    %cst_23 = arith.constant dense<0.000000e+00> : vector<1x8x16xf32>
    %75 = tpu.matmul %74, %62, %cst_23 {dimension_numbers = #tpu.dot_dimension_numbers<[2], [1], [1], [2], [0, 0, 0, 1, 1, 2], [0], [0]>} : vector<1x8x8xbf16>, vector<1x8x16xbf16>, vector<1x8x16xf32> -> vector<1x8x16xf32>
    "tpu.trace_stop"() : () -> ()
    %76 = arith.truncf %75 : vector<1x8x16xf32> to vector<1x8x16xbf16>
    %77 = vector.extract_strided_slice %38 {offsets = [0, 0, 32], sizes = [1, 8, 16], strides = [1, 1, 1]} : vector<1x8x64xbf16> to vector<1x8x16xbf16>
    %78 = vector.extract_strided_slice %40 {offsets = [0, 0, 32], sizes = [1, 8, 16], strides = [1, 1, 1]} : vector<1x8x64xbf16> to vector<1x8x16xbf16>
    %79 = vector.extract_strided_slice %42 {offsets = [0, 0, 32], sizes = [1, 8, 16], strides = [1, 1, 1]} : vector<1x8x64xbf16> to vector<1x8x16xbf16>
    "tpu.trace_start"() <{level = 10 : i32, message = "bqd,bkd->bqk"}> : () -> ()
    %cst_24 = arith.constant dense<0.000000e+00> : vector<1x8x8xf32>
    %80 = tpu.matmul %77, %78, %cst_24 {dimension_numbers = #tpu.dot_dimension_numbers<[2], [2], [1], [1], [0, 0, 0, 1, 1, 1], [0], [0]>} : vector<1x8x16xbf16>, vector<1x8x16xbf16>, vector<1x8x8xf32> -> vector<1x8x8xf32>
    "tpu.trace_stop"() : () -> ()
    %cst_25 = arith.constant dense<0xFF800000> : vector<1x8xf32>
    %81 = vector.multi_reduction <maximumf>, %80, %cst_25 [2] : vector<1x8x8xf32> to vector<1x8xf32>
    %82 = vector.shape_cast %81 : vector<1x8xf32> to vector<1x8x1xf32>
    %83 = vector.broadcast %82 : vector<1x8x1xf32> to vector<1x8x8xf32>
    %84 = arith.subf %80, %83 : vector<1x8x8xf32>
    %85 = math.exp %84 : vector<1x8x8xf32>
    %cst_26 = arith.constant dense<0.000000e+00> : vector<1x8xf32>
    %86 = vector.multi_reduction <add>, %85, %cst_26 [2] : vector<1x8x8xf32> to vector<1x8xf32>
    %87 = vector.shape_cast %86 : vector<1x8xf32> to vector<1x8x1xf32>
    %88 = tpu.reciprocal %87 {approx = true} : vector<1x8x1xf32> -> vector<1x8x1xf32>
    %89 = vector.broadcast %88 : vector<1x8x1xf32> to vector<1x8x8xf32>
    %90 = arith.mulf %85, %89 : vector<1x8x8xf32>
    %91 = arith.truncf %90 : vector<1x8x8xf32> to vector<1x8x8xbf16>
    "tpu.trace_start"() <{level = 10 : i32, message = "bqk,bkd->bqd"}> : () -> ()
    %cst_27 = arith.constant dense<0.000000e+00> : vector<1x8x16xf32>
    %92 = tpu.matmul %91, %79, %cst_27 {dimension_numbers = #tpu.dot_dimension_numbers<[2], [1], [1], [2], [0, 0, 0, 1, 1, 2], [0], [0]>} : vector<1x8x8xbf16>, vector<1x8x16xbf16>, vector<1x8x16xf32> -> vector<1x8x16xf32>
    "tpu.trace_stop"() : () -> ()
    %93 = arith.truncf %92 : vector<1x8x16xf32> to vector<1x8x16xbf16>
    %94 = vector.extract_strided_slice %38 {offsets = [0, 0, 48], sizes = [1, 8, 16], strides = [1, 1, 1]} : vector<1x8x64xbf16> to vector<1x8x16xbf16>
    %95 = vector.extract_strided_slice %40 {offsets = [0, 0, 48], sizes = [1, 8, 16], strides = [1, 1, 1]} : vector<1x8x64xbf16> to vector<1x8x16xbf16>
    %96 = vector.extract_strided_slice %42 {offsets = [0, 0, 48], sizes = [1, 8, 16], strides = [1, 1, 1]} : vector<1x8x64xbf16> to vector<1x8x16xbf16>
    "tpu.trace_start"() <{level = 10 : i32, message = "bqd,bkd->bqk"}> : () -> ()
    %cst_28 = arith.constant dense<0.000000e+00> : vector<1x8x8xf32>
    %97 = tpu.matmul %94, %95, %cst_28 {dimension_numbers = #tpu.dot_dimension_numbers<[2], [2], [1], [1], [0, 0, 0, 1, 1, 1], [0], [0]>} : vector<1x8x16xbf16>, vector<1x8x16xbf16>, vector<1x8x8xf32> -> vector<1x8x8xf32>
    "tpu.trace_stop"() : () -> ()
    %cst_29 = arith.constant dense<0xFF800000> : vector<1x8xf32>
    %98 = vector.multi_reduction <maximumf>, %97, %cst_29 [2] : vector<1x8x8xf32> to vector<1x8xf32>
    %99 = vector.shape_cast %98 : vector<1x8xf32> to vector<1x8x1xf32>
    %100 = vector.broadcast %99 : vector<1x8x1xf32> to vector<1x8x8xf32>
    %101 = arith.subf %97, %100 : vector<1x8x8xf32>
    %102 = math.exp %101 : vector<1x8x8xf32>
    %cst_30 = arith.constant dense<0.000000e+00> : vector<1x8xf32>
    %103 = vector.multi_reduction <add>, %102, %cst_30 [2] : vector<1x8x8xf32> to vector<1x8xf32>
    %104 = vector.shape_cast %103 : vector<1x8xf32> to vector<1x8x1xf32>
    %105 = tpu.reciprocal %104 {approx = true} : vector<1x8x1xf32> -> vector<1x8x1xf32>
    %106 = vector.broadcast %105 : vector<1x8x1xf32> to vector<1x8x8xf32>
    %107 = arith.mulf %102, %106 : vector<1x8x8xf32>
    %108 = arith.truncf %107 : vector<1x8x8xf32> to vector<1x8x8xbf16>
    "tpu.trace_start"() <{level = 10 : i32, message = "bqk,bkd->bqd"}> : () -> ()
    %cst_31 = arith.constant dense<0.000000e+00> : vector<1x8x16xf32>
    %109 = tpu.matmul %108, %96, %cst_31 {dimension_numbers = #tpu.dot_dimension_numbers<[2], [1], [1], [2], [0, 0, 0, 1, 1, 2], [0], [0]>} : vector<1x8x8xbf16>, vector<1x8x16xbf16>, vector<1x8x16xf32> -> vector<1x8x16xf32>
    "tpu.trace_stop"() : () -> ()
    %110 = arith.truncf %109 : vector<1x8x16xf32> to vector<1x8x16xbf16>
    %111 = tpu.concatenate %59, %76, %93, %110 in 2 : vector<1x8x16xbf16>, vector<1x8x16xbf16>, vector<1x8x16xbf16>, vector<1x8x16xbf16> -> vector<1x8x64xbf16>
    %112 = vector.shape_cast %111 : vector<1x8x64xbf16> to vector<8x64xbf16>
    %c0_32 = arith.constant 0 : index
    %c0_33 = arith.constant 0 : index
    %113 = vector.load %arg6[%c0_32, %c0_33] : memref<64x32xbf16, #tpu.memory_space<vmem>>, vector<64x32xbf16>
    %cst_34 = arith.constant dense<0.000000e+00> : vector<8x32xf32>
    %114 = tpu.matmul %112, %113, %cst_34 {dimension_numbers = #tpu.dot_dimension_numbers<[1], [0], [0], [1], [0, 0, 1, 1], [], []>} : vector<8x64xbf16>, vector<64x32xbf16>, vector<8x32xf32> -> vector<8x32xf32>
    %c0_35 = arith.constant 0 : index
    %c0_36 = arith.constant 0 : index
    %115 = vector.load %arg7[%c0_35, %c0_36] : memref<1x32xf32, #tpu.memory_space<vmem>>, vector<1x32xf32>
    %116 = vector.broadcast %115 : vector<1x32xf32> to vector<8x32xf32>
    %117 = arith.addf %114, %116 : vector<8x32xf32>
    %118 = vector.shape_cast %117 : vector<8x32xf32> to vector<1x8x32xf32>
    %119 = arith.addf %118, %0 : vector<1x8x32xf32>
    %c0_37 = arith.constant 0 : index
    %c0_38 = arith.constant 0 : index
    %120 = vector.load %arg8[%c0_37, %c0_38] : memref<1x32xf32, #tpu.memory_space<vmem>>, vector<1x32xf32>
    %c0_39 = arith.constant 0 : index
    %c0_40 = arith.constant 0 : index
    %121 = vector.load %arg9[%c0_39, %c0_40] : memref<1x32xf32, #tpu.memory_space<vmem>>, vector<1x32xf32>
    %cst_41 = arith.constant dense<0.000000e+00> : vector<1x8xf32>
    %122 = vector.multi_reduction <add>, %119, %cst_41 [2] : vector<1x8x32xf32> to vector<1x8xf32>
    %123 = vector.shape_cast %122 : vector<1x8xf32> to vector<1x8x1xf32>
    %cst_42 = arith.constant 3.200000e+01 : f32
    %124 = vector.broadcast %cst_42 : f32 to vector<1x8x1xf32>
    %125 = arith.divf %123, %124 : vector<1x8x1xf32>
    %126 = vector.broadcast %125 : vector<1x8x1xf32> to vector<1x8x32xf32>
    %127 = arith.subf %119, %126 : vector<1x8x32xf32>
    %128 = arith.mulf %127, %127 : vector<1x8x32xf32>
    %cst_43 = arith.constant dense<0.000000e+00> : vector<1x8xf32>
    %129 = vector.multi_reduction <add>, %128, %cst_43 [2] : vector<1x8x32xf32> to vector<1x8xf32>
    %130 = vector.shape_cast %129 : vector<1x8xf32> to vector<1x8x1xf32>
    %cst_44 = arith.constant 3.200000e+01 : f32
    %131 = vector.broadcast %cst_44 : f32 to vector<1x8x1xf32>
    %132 = arith.divf %130, %131 : vector<1x8x1xf32>
    %133 = vector.broadcast %125 : vector<1x8x1xf32> to vector<1x8x32xf32>
    %134 = arith.subf %119, %133 : vector<1x8x32xf32>
    %cst_45 = arith.constant 9.99999997E-7 : f32
    %135 = vector.broadcast %cst_45 : f32 to vector<1x8x1xf32>
    %136 = arith.addf %132, %135 : vector<1x8x1xf32>
    %137 = math.rsqrt %136 : vector<1x8x1xf32>
    %138 = vector.broadcast %137 : vector<1x8x1xf32> to vector<1x8x32xf32>
    %139 = arith.mulf %134, %138 : vector<1x8x32xf32>
    %140 = vector.shape_cast %120 : vector<1x32xf32> to vector<1x1x32xf32>
    %141 = vector.broadcast %140 : vector<1x1x32xf32> to vector<1x8x32xf32>
    %142 = arith.mulf %139, %141 : vector<1x8x32xf32>
    %143 = vector.shape_cast %121 : vector<1x32xf32> to vector<1x1x32xf32>
    %144 = vector.broadcast %143 : vector<1x1x32xf32> to vector<1x8x32xf32>
    %145 = arith.addf %142, %144 : vector<1x8x32xf32>
    %146 = vector.shape_cast %145 : vector<1x8x32xf32> to vector<8x32xf32>
    %147 = arith.truncf %146 : vector<8x32xf32> to vector<8x32xbf16>
    %c0_46 = arith.constant 0 : index
    %c0_47 = arith.constant 0 : index
    %148 = vector.load %arg10[%c0_46, %c0_47] : memref<32x64xbf16, #tpu.memory_space<vmem>>, vector<32x64xbf16>
    %cst_48 = arith.constant dense<0.000000e+00> : vector<8x64xf32>
    %149 = tpu.matmul %147, %148, %cst_48 {dimension_numbers = #tpu.dot_dimension_numbers<[1], [0], [0], [1], [0, 0, 1, 1], [], []>} : vector<8x32xbf16>, vector<32x64xbf16>, vector<8x64xf32> -> vector<8x64xf32>
    %c0_49 = arith.constant 0 : index
    %c0_50 = arith.constant 0 : index
    %150 = vector.load %arg11[%c0_49, %c0_50] : memref<1x64xf32, #tpu.memory_space<vmem>>, vector<1x64xf32>
    %151 = vector.broadcast %150 : vector<1x64xf32> to vector<8x64xf32>
    %152 = arith.addf %149, %151 : vector<8x64xf32>
    %cst_51 = arith.constant 0.000000e+00 : f32
    %153 = vector.broadcast %cst_51 : f32 to vector<8x64xf32>
    %154 = arith.maximumf %152, %153 : vector<8x64xf32>
    %155 = arith.truncf %154 : vector<8x64xf32> to vector<8x64xbf16>
    %c0_52 = arith.constant 0 : index
    %c0_53 = arith.constant 0 : index
    %156 = vector.load %arg12[%c0_52, %c0_53] : memref<64x32xbf16, #tpu.memory_space<vmem>>, vector<64x32xbf16>
    %cst_54 = arith.constant dense<0.000000e+00> : vector<8x32xf32>
    %157 = tpu.matmul %155, %156, %cst_54 {dimension_numbers = #tpu.dot_dimension_numbers<[1], [0], [0], [1], [0, 0, 1, 1], [], []>} : vector<8x64xbf16>, vector<64x32xbf16>, vector<8x32xf32> -> vector<8x32xf32>
    %c0_55 = arith.constant 0 : index
    %c0_56 = arith.constant 0 : index
    %158 = vector.load %arg13[%c0_55, %c0_56] : memref<1x32xf32, #tpu.memory_space<vmem>>, vector<1x32xf32>
    %159 = vector.broadcast %158 : vector<1x32xf32> to vector<8x32xf32>
    %160 = arith.addf %157, %159 : vector<8x32xf32>
    %161 = vector.shape_cast %160 : vector<8x32xf32> to vector<1x8x32xf32>
    %162 = arith.addf %161, %119 : vector<1x8x32xf32>
    %c0_57 = arith.constant 0 : index
    %c0_58 = arith.constant 0 : index
    %c0_59 = arith.constant 0 : index
    %163 = vector.load %arg14[%c0_57, %c0_58, %c0_59] : memref<1x8x32xf32, #tpu.memory_space<vmem>>, vector<1x8x32xf32>
    tpu.vector_store %arg14[%c0_57, %c0_58, %c0_59], %162 {strides = array<i32>} : memref<1x8x32xf32, #tpu.memory_space<vmem>>, vector<1x8x32xf32>,
    return
  }
  func.func @transform_0(%arg0: i32) -> (i32, i32, i32) {
    %c0_i32 = arith.constant 0 : i32
    %c0_i32_0 = arith.constant 0 : i32
    %c0_i32_1 = arith.constant 0 : i32
    return %arg0, %c0_i32, %c0_i32_0 : i32, i32, i32
  }
  func.func @transform_1(%arg0: i32) -> (i32, i32) {
    %c0_i32 = arith.constant 0 : i32
    %c0_i32_0 = arith.constant 0 : i32
    %c0_i32_1 = arith.constant 0 : i32
    return %c0_i32, %c0_i32_0 : i32, i32
  }
  func.func @transform_2(%arg0: i32) -> (i32, i32) {
    %c0_i32 = arith.constant 0 : i32
    %c0_i32_0 = arith.constant 0 : i32
    %c0_i32_1 = arith.constant 0 : i32
    return %c0_i32, %c0_i32_0 : i32, i32
  }
  func.func @transform_3(%arg0: i32) -> (i32, i32) {
    %c0_i32 = arith.constant 0 : i32
    %c0_i32_0 = arith.constant 0 : i32
    %c0_i32_1 = arith.constant 0 : i32
    return %c0_i32, %c0_i32_0 : i32, i32
  }
  func.func @transform_4(%arg0: i32) -> (i32, i32) {
    %c0_i32 = arith.constant 0 : i32
    %c0_i32_0 = arith.constant 0 : i32
    %c0_i32_1 = arith.constant 0 : i32
    return %c0_i32, %c0_i32_0 : i32, i32
  }
  func.func @transform_5(%arg0: i32) -> (i32, i32) {
    %c0_i32 = arith.constant 0 : i32
    %c0_i32_0 = arith.constant 0 : i32
    %c0_i32_1 = arith.constant 0 : i32
    return %c0_i32, %c0_i32_0 : i32, i32
  }
  func.func @transform_6(%arg0: i32) -> (i32, i32) {
    %c0_i32 = arith.constant 0 : i32
    %c0_i32_0 = arith.constant 0 : i32
    %c0_i32_1 = arith.constant 0 : i32
    return %c0_i32, %c0_i32_0 : i32, i32
  }
  func.func @transform_7(%arg0: i32) -> (i32, i32) {
    %c0_i32 = arith.constant 0 : i32
    %c0_i32_0 = arith.constant 0 : i32
    %c0_i32_1 = arith.constant 0 : i32
    return %c0_i32, %c0_i32_0 : i32, i32
  }
  func.func @transform_8(%arg0: i32) -> (i32, i32) {
    %c0_i32 = arith.constant 0 : i32
    %c0_i32_0 = arith.constant 0 : i32
    %c0_i32_1 = arith.constant 0 : i32
    return %c0_i32, %c0_i32_0 : i32, i32
  }
  func.func @transform_9(%arg0: i32) -> (i32, i32) {
    %c0_i32 = arith.constant 0 : i32
    %c0_i32_0 = arith.constant 0 : i32
    %c0_i32_1 = arith.constant 0 : i32
    return %c0_i32, %c0_i32_0 : i32, i32
  }
  func.func @transform_10(%arg0: i32) -> (i32, i32) {
    %c0_i32 = arith.constant 0 : i32
    %c0_i32_0 = arith.constant 0 : i32
    %c0_i32_1 = arith.constant 0 : i32
    return %c0_i32, %c0_i32_0 : i32, i32
  }
  func.func @transform_11(%arg0: i32) -> (i32, i32) {
    %c0_i32 = arith.constant 0 : i32
    %c0_i32_0 = arith.constant 0 : i32
    %c0_i32_1 = arith.constant 0 : i32
    return %c0_i32, %c0_i32_0 : i32, i32
  }
  func.func @transform_12(%arg0: i32) -> (i32, i32) {
    %c0_i32 = arith.constant 0 : i32
    %c0_i32_0 = arith.constant 0 : i32
    %c0_i32_1 = arith.constant 0 : i32
    return %c0_i32, %c0_i32_0 : i32, i32
  }
  func.func @transform_13(%arg0: i32) -> (i32, i32, i32) {
    %c0_i32 = arith.constant 0 : i32
    %c0_i32_0 = arith.constant 0 : i32
    %c0_i32_1 = arith.constant 0 : i32
    return %arg0, %c0_i32, %c0_i32_0 : i32, i32, i32
  }
}

</mosaic_0001>

<llo_original>
// kernel: tpu_custom_call.1
$region0: #{tpu_custom_call.1}
  #allocation0 [shape = 'u32[]', space=smem, size = 0x4, offset = 0x4, fixed_abs, tag = 'smem constant byte address 0x4 - core index']
  #allocation1 [shape = 'u32[144,128]{1,0:T(1,128)}', space=vmem, size = 0x12000, scoped, tag = 'internal scratch']
  %s0 = inlined_call_operand.vmem [shape: f32[2,8,32], index: 0, kind: input, shape index: {}]
  %s1 = inlined_call_operand.vmem [shape: f32[1,32], index: 1, kind: input, shape index: {}]
  %s2 = inlined_call_operand.vmem [shape: f32[1,32], index: 2, kind: input, shape index: {}]
  %s3 = inlined_call_operand.vmem [shape: bf16[32,192], index: 3, kind: input, shape index: {}]
  %s4 = inlined_call_operand.vmem [shape: f32[1,192], index: 4, kind: input, shape index: {}]
  %s5 = inlined_call_operand.vmem [shape: bf16[64,32], index: 5, kind: input, shape index: {}]
  %s6 = inlined_call_operand.vmem [shape: f32[1,32], index: 6, kind: input, shape index: {}]
  %s7 = inlined_call_operand.vmem [shape: f32[1,32], index: 7, kind: input, shape index: {}]
  %s8 = inlined_call_operand.vmem [shape: f32[1,32], index: 8, kind: input, shape index: {}]
  %s9 = inlined_call_operand.vmem [shape: bf16[32,64], index: 9, kind: input, shape index: {}]
  %s10 = inlined_call_operand.vmem [shape: f32[1,64], index: 10, kind: input, shape index: {}]
  %s11 = inlined_call_operand.vmem [shape: bf16[64,32], index: 11, kind: input, shape index: {}]
  %s12 = inlined_call_operand.vmem [shape: f32[1,32], index: 12, kind: input, shape index: {}]
  %s13 = inlined_call_operand.hbm [shape: f32[2,8,32], index: 13, kind: output, shape index: {}]
  %s14 = sld [smem:[#allocation0]]
  $region85: #{tpu_custom_call.1} parent=0
    _
  %s16 = ssub.s32 1, %s14
  %s17 = scalar_select 0, %s16, %s14
  $region1: #{tpu_custom_call.1} parent=0
    #allocation2 [shape = 'u8[8192]{0}', space=vmem, size = 0x2000, scoped, tag = 'output window, operand 0']
    #allocation3 [shape = 's32[2]{0}', space=sflag, size = 0x8, scoped, tag = 'scoped memory for tpu_custom_call.1']
    %18 = vsyncpa [#allocation3], 0
    %s19 = scalar_lea.sflag [#allocation3], 1
    %20 = vsyncpa %s19, 0
    loop: start=0, step=1, limit=4
    $region2: #{tpu_custom_call.1} parent=1 // loop_pre_header
      _
    $region3: #{tpu_custom_call.1} parent=1 // loop_header
      %s22 = sphi 0, %s26
      %p23 = scmp.ge.s32.totalorder %s22, 4
      %s32 = sphi 0, %s34
      %s35 = sphi 0, %s32
      %s36 = sphi 0, %s35
      %s52 = sphi 0, %s36
      %s56 = sphi 0, %s56
      %s58 = sphi 0, %s56
      %s59 = sphi 0, %s58
      %s73 = sphi 0, %s59
      %s77 = sphi 0, %s77
      %s79 = sphi 0, %s77
      %s80 = sphi 0, %s79
      %s94 = sphi 0, %s80
      %s98 = sphi 0, %s98
      %s100 = sphi 0, %s98
      %s101 = sphi 0, %s100
      %s115 = sphi 0, %s101
      %s119 = sphi 0, %s119
      %s121 = sphi 0, %s119
      %s122 = sphi 0, %s121
      %s136 = sphi 0, %s122
      %s140 = sphi 0, %s140
      %s142 = sphi 0, %s140
      %s143 = sphi 0, %s142
      %s157 = sphi 0, %s143
      %s161 = sphi 0, %s161
      %s163 = sphi 0, %s161
      %s164 = sphi 0, %s163
      %s178 = sphi 0, %s164
      %s182 = sphi 0, %s182
      %s184 = sphi 0, %s182
      %s185 = sphi 0, %s184
      %s199 = sphi 0, %s185
      %s203 = sphi 0, %s203
      %s205 = sphi 0, %s203
      %s206 = sphi 0, %s205
      %s220 = sphi 0, %s206
      %s224 = sphi 0, %s224
      %s226 = sphi 0, %s224
      %s227 = sphi 0, %s226
      %s241 = sphi 0, %s227
      %s245 = sphi 0, %s245
      %s247 = sphi 0, %s245
      %s248 = sphi 0, %s247
      %s262 = sphi 0, %s248
      %s266 = sphi 0, %s266
      %s268 = sphi 0, %s266
      %s269 = sphi 0, %s268
      %s283 = sphi 0, %s269
      %s287 = sphi 0, %s287
      %s289 = sphi 0, %s287
      %s290 = sphi 0, %s289
      %s304 = sphi 0, %s290
      %s310 = sphi 0, %s312
      %s313 = sphi 0, %s310
      %s314 = sphi 0, %s313
      %s330 = sphi 0, %s314
    $region4: #{tpu_custom_call.1} parent=1 // loop_header_branch
      %25 = sbr.rel (%p23) target = $region8
    $region5: #{tpu_custom_call.1} parent=1 // loop_body
      %s27 = ssub.s32 %s22, 1
      %s28 = ssub.s32 %s22, 2
      %s29 = sadd.s32 %s22, 1
      %s30 = ssub.s32 %s22, %s29
      %p31 = scmp.eq.s32.totalorder %s30, 0
      %s33 = sadd.s32 %s32, 1
      %s34 = scalar_select %p31, %s32, %s33
      %p37 = pneg %p31
      %p38 = scmp.eq.s32.totalorder %s22, 1
      %p39 = por %p37, %p38
      %p40 = scmp.ne.s32.totalorder %s32, %s35
      %p41 = scmp.eq.s32.totalorder %s22, 0
      %p42 = por %p40, %p41
      %p43 = scmp.ne.s32.totalorder %s32, %s35
      %p44 = scmp.eq.s32.totalorder %s27, 1
      %p45 = por %p43, %p44
      %p46 = scmp.ne.s32.totalorder %s35, %s36
      %p47 = scmp.eq.s32.totalorder %s27, 0
      %p48 = por %p46, %p47
      %p49 = scmp.ne.s32.totalorder %s35, %s36
      %p50 = scmp.eq.s32.totalorder %s28, 1
      %p51 = por %p49, %p50
      %p53 = scmp.ne.s32.totalorder %s36, %s52
      %p54 = scmp.eq.s32.totalorder %s28, 0
      %p55 = por %p53, %p54
      %s57 = sadd.s32 %s56, 1
      %p60 = scmp.eq.s32.totalorder %s22, 1
      %p61 = scmp.ne.s32.totalorder %s56, %s58
      %p62 = scmp.eq.s32.totalorder %s22, 0
      %p63 = por %p61, %p62
      %p64 = scmp.ne.s32.totalorder %s56, %s58
      %p65 = scmp.eq.s32.totalorder %s27, 1
      %p66 = por %p64, %p65
      %p67 = scmp.ne.s32.totalorder %s58, %s59
      %p68 = scmp.eq.s32.totalorder %s27, 0
      %p69 = por %p67, %p68
      %p70 = scmp.ne.s32.totalorder %s58, %s59
      %p71 = scmp.eq.s32.totalorder %s28, 1
      %p72 = por %p70, %p71
      %p74 = scmp.ne.s32.totalorder %s59, %s73
      %p75 = scmp.eq.s32.totalorder %s28, 0
      %p76 = por %p74, %p75
      %s78 = sadd.s32 %s77, 1
      %p81 = scmp.eq.s32.totalorder %s22, 1
      %p82 = scmp.ne.s32.totalorder %s77, %s79
      %p83 = scmp.eq.s32.totalorder %s22, 0
      %p84 = por %p82, %p83
      %p85 = scmp.ne.s32.totalorder %s77, %s79
      %p86 = scmp.eq.s32.totalorder %s27, 1
      %p87 = por %p85, %p86
      %p88 = scmp.ne.s32.totalorder %s79, %s80
      %p89 = scmp.eq.s32.totalorder %s27, 0
      %p90 = por %p88, %p89
      %p91 = scmp.ne.s32.totalorder %s79, %s80
      %p92 = scmp.eq.s32.totalorder %s28, 1
      %p93 = por %p91, %p92
      %p95 = scmp.ne.s32.totalorder %s80, %s94
      %p96 = scmp.eq.s32.totalorder %s28, 0
      %p97 = por %p95, %p96
      %s99 = sadd.s32 %s98, 1
      %p102 = scmp.eq.s32.totalorder %s22, 1
      %p103 = scmp.ne.s32.totalorder %s98, %s100
      %p104 = scmp.eq.s32.totalorder %s22, 0
      %p105 = por %p103, %p104
      %p106 = scmp.ne.s32.totalorder %s98, %s100
      %p107 = scmp.eq.s32.totalorder %s27, 1
      %p108 = por %p106, %p107
      %p109 = scmp.ne.s32.totalorder %s100, %s101
      %p110 = scmp.eq.s32.totalorder %s27, 0
      %p111 = por %p109, %p110
      %p112 = scmp.ne.s32.totalorder %s100, %s101
      %p113 = scmp.eq.s32.totalorder %s28, 1
      %p114 = por %p112, %p113
      %p116 = scmp.ne.s32.totalorder %s101, %s115
      %p117 = scmp.eq.s32.totalorder %s28, 0
      %p118 = por %p116, %p117
      %s120 = sadd.s32 %s119, 1
      %p123 = scmp.eq.s32.totalorder %s22, 1
      %p124 = scmp.ne.s32.totalorder %s119, %s121
      %p125 = scmp.eq.s32.totalorder %s22, 0
      %p126 = por %p124, %p125
      %p127 = scmp.ne.s32.totalorder %s119, %s121
      %p128 = scmp.eq.s32.totalorder %s27, 1
      %p129 = por %p127, %p128
      %p130 = scmp.ne.s32.totalorder %s121, %s122
      %p131 = scmp.eq.s32.totalorder %s27, 0
      %p132 = por %p130, %p131
      %p133 = scmp.ne.s32.totalorder %s121, %s122
      %p134 = scmp.eq.s32.totalorder %s28, 1
      %p135 = por %p133, %p134
      %p137 = scmp.ne.s32.totalorder %s122, %s136
      %p138 = scmp.eq.s32.totalorder %s28, 0
      %p139 = por %p137, %p138
      %s141 = sadd.s32 %s140, 1
      %p144 = scmp.eq.s32.totalorder %s22, 1
      %p145 = scmp.ne.s32.totalorder %s140, %s142
      %p146 = scmp.eq.s32.totalorder %s22, 0
      %p147 = por %p145, %p146
      %p148 = scmp.ne.s32.totalorder %s140, %s142
      %p149 = scmp.eq.s32.totalorder %s27, 1
      %p150 = por %p148, %p149
      %p151 = scmp.ne.s32.totalorder %s142, %s143
      %p152 = scmp.eq.s32.totalorder %s27, 0
      %p153 = por %p151, %p152
      %p154 = scmp.ne.s32.totalorder %s142, %s143
      %p155 = scmp.eq.s32.totalorder %s28, 1
      %p156 = por %p154, %p155
      %p158 = scmp.ne.s32.totalorder %s143, %s157
      %p159 = scmp.eq.s32.totalorder %s28, 0
      %p160 = por %p158, %p159
      %s162 = sadd.s32 %s161, 1
      %p165 = scmp.eq.s32.totalorder %s22, 1
      %p166 = scmp.ne.s32.totalorder %s161, %s163
      %p167 = scmp.eq.s32.totalorder %s22, 0
      %p168 = por %p166, %p167
      %p169 = scmp.ne.s32.totalorder %s161, %s163
      %p170 = scmp.eq.s32.totalorder %s27, 1
      %p171 = por %p169, %p170
      %p172 = scmp.ne.s32.totalorder %s163, %s164
      %p173 = scmp.eq.s32.totalorder %s27, 0
      %p174 = por %p172, %p173
      %p175 = scmp.ne.s32.totalorder %s163, %s164
      %p176 = scmp.eq.s32.totalorder %s28, 1
      %p177 = por %p175, %p176
      %p179 = scmp.ne.s32.totalorder %s164, %s178
      %p180 = scmp.eq.s32.totalorder %s28, 0
      %p181 = por %p179, %p180
      %s183 = sadd.s32 %s182, 1
      %p186 = scmp.eq.s32.totalorder %s22, 1
      %p187 = scmp.ne.s32.totalorder %s182, %s184
      %p188 = scmp.eq.s32.totalorder %s22, 0
      %p189 = por %p187, %p188
      %p190 = scmp.ne.s32.totalorder %s182, %s184
      %p191 = scmp.eq.s32.totalorder %s27, 1
      %p192 = por %p190, %p191
      %p193 = scmp.ne.s32.totalorder %s184, %s185
      %p194 = scmp.eq.s32.totalorder %s27, 0
      %p195 = por %p193, %p194
      %p196 = scmp.ne.s32.totalorder %s184, %s185
      %p197 = scmp.eq.s32.totalorder %s28, 1
      %p198 = por %p196, %p197
      %p200 = scmp.ne.s32.totalorder %s185, %s199
      %p201 = scmp.eq.s32.totalorder %s28, 0
      %p202 = por %p200, %p201
      %s204 = sadd.s32 %s203, 1
      %p207 = scmp.eq.s32.totalorder %s22, 1
      %p208 = scmp.ne.s32.totalorder %s203, %s205
      %p209 = scmp.eq.s32.totalorder %s22, 0
      %p210 = por %p208, %p209
      %p211 = scmp.ne.s32.totalorder %s203, %s205
      %p212 = scmp.eq.s32.totalorder %s27, 1
      %p213 = por %p211, %p212
      %p214 = scmp.ne.s32.totalorder %s205, %s206
      %p215 = scmp.eq.s32.totalorder %s27, 0
      %p216 = por %p214, %p215
      %p217 = scmp.ne.s32.totalorder %s205, %s206
      %p218 = scmp.eq.s32.totalorder %s28, 1
      %p219 = por %p217, %p218
      %p221 = scmp.ne.s32.totalorder %s206, %s220
      %p222 = scmp.eq.s32.totalorder %s28, 0
      %p223 = por %p221, %p222
      %s225 = sadd.s32 %s224, 1
      %p228 = scmp.eq.s32.totalorder %s22, 1
      %p229 = scmp.ne.s32.totalorder %s224, %s226
      %p230 = scmp.eq.s32.totalorder %s22, 0
      %p231 = por %p229, %p230
      %p232 = scmp.ne.s32.totalorder %s224, %s226
      %p233 = scmp.eq.s32.totalorder %s27, 1
      %p234 = por %p232, %p233
      %p235 = scmp.ne.s32.totalorder %s226, %s227
      %p236 = scmp.eq.s32.totalorder %s27, 0
      %p237 = por %p235, %p236
      %p238 = scmp.ne.s32.totalorder %s226, %s227
      %p239 = scmp.eq.s32.totalorder %s28, 1
      %p240 = por %p238, %p239
      %p242 = scmp.ne.s32.totalorder %s227, %s241
      %p243 = scmp.eq.s32.totalorder %s28, 0
      %p244 = por %p242, %p243
      %s246 = sadd.s32 %s245, 1
      %p249 = scmp.eq.s32.totalorder %s22, 1
      %p250 = scmp.ne.s32.totalorder %s245, %s247
      %p251 = scmp.eq.s32.totalorder %s22, 0
      %p252 = por %p250, %p251
      %p253 = scmp.ne.s32.totalorder %s245, %s247
      %p254 = scmp.eq.s32.totalorder %s27, 1
      %p255 = por %p253, %p254
      %p256 = scmp.ne.s32.totalorder %s247, %s248
      %p257 = scmp.eq.s32.totalorder %s27, 0
      %p258 = por %p256, %p257
      %p259 = scmp.ne.s32.totalorder %s247, %s248
      %p260 = scmp.eq.s32.totalorder %s28, 1
      %p261 = por %p259, %p260
      %p263 = scmp.ne.s32.totalorder %s248, %s262
      %p264 = scmp.eq.s32.totalorder %s28, 0
      %p265 = por %p263, %p264
      %s267 = sadd.s32 %s266, 1
      %p270 = scmp.eq.s32.totalorder %s22, 1
      %p271 = scmp.ne.s32.totalorder %s266, %s268
      %p272 = scmp.eq.s32.totalorder %s22, 0
      %p273 = por %p271, %p272
      %p274 = scmp.ne.s32.totalorder %s266, %s268
      %p275 = scmp.eq.s32.totalorder %s27, 1
      %p276 = por %p274, %p275
      %p277 = scmp.ne.s32.totalorder %s268, %s269
      %p278 = scmp.eq.s32.totalorder %s27, 0
      %p279 = por %p277, %p278
      %p280 = scmp.ne.s32.totalorder %s268, %s269
      %p281 = scmp.eq.s32.totalorder %s28, 1
      %p282 = por %p280, %p281
      %p284 = scmp.ne.s32.totalorder %s269, %s283
      %p285 = scmp.eq.s32.totalorder %s28, 0
      %p286 = por %p284, %p285
      %s288 = sadd.s32 %s287, 1
      %p291 = scmp.eq.s32.totalorder %s22, 1
      %p292 = scmp.ne.s32.totalorder %s287, %s289
      %p293 = scmp.eq.s32.totalorder %s22, 0
      %p294 = por %p292, %p293
      %p295 = scmp.ne.s32.totalorder %s287, %s289
      %p296 = scmp.eq.s32.totalorder %s27, 1
      %p297 = por %p295, %p296
      %p298 = scmp.ne.s32.totalorder %s289, %s290
      %p299 = scmp.eq.s32.totalorder %s27, 0
      %p300 = por %p298, %p299
      %p301 = scmp.ne.s32.totalorder %s289, %s290
      %p302 = scmp.eq.s32.totalorder %s28, 1
      %p303 = por %p301, %p302
      %p305 = scmp.ne.s32.totalorder %s290, %s304
      %p306 = scmp.eq.s32.totalorder %s28, 0
      %p307 = por %p305, %p306
      %s308 = ssub.s32 %s22, %s29
      %p309 = scmp.eq.s32.totalorder %s308, 0
      %s311 = sadd.s32 %s310, 1
      %s312 = scalar_select %p309, %s310, %s311
      %p315 = pneg %p309
      %p316 = scmp.eq.s32.totalorder %s22, 1
      %p317 = por %p315, %p316
      %p318 = scmp.ne.s32.totalorder %s310, %s313
      %p319 = scmp.eq.s32.totalorder %s22, 0
      %p320 = por %p318, %p319
      %p321 = scmp.ne.s32.totalorder %s310, %s313
      %p322 = scmp.eq.s32.totalorder %s27, 1
      %p323 = por %p321, %p322
      %p324 = scmp.ne.s32.totalorder %s313, %s314
      %p325 = scmp.eq.s32.totalorder %s27, 0
      %p326 = por %p324, %p325
      %p327 = scmp.ne.s32.totalorder %s313, %s314
      %p328 = scmp.eq.s32.totalorder %s28, 1
      %p329 = por %p327, %p328
      %p331 = scmp.ne.s32.totalorder %s314, %s330
      %p332 = scmp.eq.s32.totalorder %s28, 0
      %p333 = por %p331, %p332
      %p334 = scmp.le.s32.totalorder 1, %s22
      %p335 = scmp.lt.s32.totalorder %s22, 3
      %p336 = pnand %p334, %p335
      %p337 = pneg %p336
      // Predicated region
      $region9: #{tpu_custom_call.1} parent=5 // pred_check
        _
      $region10: #{tpu_custom_call.1} parent=5 // pred_check_branch
        %339 = sbr.rel (%p336) target = $region12
      $region11: #{tpu_custom_call.1} parent=5 // pred_region
        %s340 = ssub.s32 %s22, 1
        // Predicated region
        $region13: #{tpu_custom_call.1} parent=11 // pred_check
          %p341 = pneg %p69
        $region14: #{tpu_custom_call.1} parent=11 // pred_check_branch
          %343 = sbr.rel (%p341) target = $region16
        $region15: #{tpu_custom_call.1} parent=11 // pred_region
          _
        $region16: #{tpu_custom_call.1} parent=11 // pred_fallthru
          _
        // Predicated region
        $region17: #{tpu_custom_call.1} parent=11 // pred_check
          %p344 = pneg %p90
        $region18: #{tpu_custom_call.1} parent=11 // pred_check_branch
          %346 = sbr.rel (%p344) target = $region20
        $region19: #{tpu_custom_call.1} parent=11 // pred_region
          _
        $region20: #{tpu_custom_call.1} parent=11 // pred_fallthru
          _
        // Predicated region
        $region21: #{tpu_custom_call.1} parent=11 // pred_check
          %p347 = pneg %p111
        $region22: #{tpu_custom_call.1} parent=11 // pred_check_branch
          %349 = sbr.rel (%p347) target = $region24
        $region23: #{tpu_custom_call.1} parent=11 // pred_region
          _
        $region24: #{tpu_custom_call.1} parent=11 // pred_fallthru
          _
        // Predicated region
        $region25: #{tpu_custom_call.1} parent=11 // pred_check
          %p350 = pneg %p132
        $region26: #{tpu_custom_call.1} parent=11 // pred_check_branch
          %352 = sbr.rel (%p350) target = $region28
        $region27: #{tpu_custom_call.1} parent=11 // pred_region
          _
        $region28: #{tpu_custom_call.1} parent=11 // pred_fallthru
          _
        // Predicated region
        $region29: #{tpu_custom_call.1} parent=11 // pred_check
          %p353 = pneg %p153
        $region30: #{tpu_custom_call.1} parent=11 // pred_check_branch
          %355 = sbr.rel (%p353) target = $region32
        $region31: #{tpu_custom_call.1} parent=11 // pred_region
          _
        $region32: #{tpu_custom_call.1} parent=11 // pred_fallthru
          _
        // Predicated region
        $region33: #{tpu_custom_call.1} parent=11 // pred_check
          %p356 = pneg %p174
        $region34: #{tpu_custom_call.1} parent=11 // pred_check_branch
          %358 = sbr.rel (%p356) target = $region36
        $region35: #{tpu_custom_call.1} parent=11 // pred_region
          _
        $region36: #{tpu_custom_call.1} parent=11 // pred_fallthru
          _
        // Predicated region
        $region37: #{tpu_custom_call.1} parent=11 // pred_check
          %p359 = pneg %p195
        $region38: #{tpu_custom_call.1} parent=11 // pred_check_branch
          %361 = sbr.rel (%p359) target = $region40
        $region39: #{tpu_custom_call.1} parent=11 // pred_region
          _
        $region40: #{tpu_custom_call.1} parent=11 // pred_fallthru
          _
        // Predicated region
        $region41: #{tpu_custom_call.1} parent=11 // pred_check
          %p362 = pneg %p216
        $region42: #{tpu_custom_call.1} parent=11 // pred_check_branch
          %364 = sbr.rel (%p362) target = $region44
        $region43: #{tpu_custom_call.1} parent=11 // pred_region
          _
        $region44: #{tpu_custom_call.1} parent=11 // pred_fallthru
          _
        // Predicated region
        $region45: #{tpu_custom_call.1} parent=11 // pred_check
          %p365 = pneg %p237
        $region46: #{tpu_custom_call.1} parent=11 // pred_check_branch
          %367 = sbr.rel (%p365) target = $region48
        $region47: #{tpu_custom_call.1} parent=11 // pred_region
          _
        $region48: #{tpu_custom_call.1} parent=11 // pred_fallthru
          _
        // Predicated region
        $region49: #{tpu_custom_call.1} parent=11 // pred_check
          %p368 = pneg %p258
        $region50: #{tpu_custom_call.1} parent=11 // pred_check_branch
          %370 = sbr.rel (%p368) target = $region52
        $region51: #{tpu_custom_call.1} parent=11 // pred_region
          _
        $region52: #{tpu_custom_call.1} parent=11 // pred_fallthru
          _
        // Predicated region
        $region53: #{tpu_custom_call.1} parent=11 // pred_check
          %p371 = pneg %p279
        $region54: #{tpu_custom_call.1} parent=11 // pred_check_branch
          %373 = sbr.rel (%p371) target = $region56
        $region55: #{tpu_custom_call.1} parent=11 // pred_region
          _
        $region56: #{tpu_custom_call.1} parent=11 // pred_fallthru
          _
        // Predicated region
        $region57: #{tpu_custom_call.1} parent=11 // pred_check
          %p374 = pneg %p300
        $region58: #{tpu_custom_call.1} parent=11 // pred_check_branch
          %376 = sbr.rel (%p374) target = $region60
        $region59: #{tpu_custom_call.1} parent=11 // pred_region
          _
        $region60: #{tpu_custom_call.1} parent=11 // pred_fallthru
          _
      $region12: #{tpu_custom_call.1} parent=5 // pred_fallthru
        _
      %p377 = scmp.lt.s32.totalorder %s22, 2
      // Predicated region
      $region61: #{tpu_custom_call.1} parent=5 // pred_check
        %p378 = pneg %p377
      $region62: #{tpu_custom_call.1} parent=5 // pred_check_branch
        %380 = sbr.rel (%p378) target = $region64
      $region63: #{tpu_custom_call.1} parent=5 // pred_region
        // Predicated region
        $region65: #{tpu_custom_call.1} parent=63 // pred_check
          %p381 = pneg %p42
        $region66: #{tpu_custom_call.1} parent=63 // pred_check_branch
          %383 = sbr.rel (%p381) target = $region68
        $region67: #{tpu_custom_call.1} parent=63 // pred_region
          %p384 = scmp.lt.s32.totalorder %s22, 1
          %s385 = scalar_select %p384, %s22, 1
          %s386 = smul.addr %s385, 8
          %s387 = scalar_lea.vmem %s0, %s386
        $region68: #{tpu_custom_call.1} parent=63 // pred_fallthru
          _
      $region64: #{tpu_custom_call.1} parent=5 // pred_fallthru
        _
      %p388 = scmp.le.s32.totalorder 1, %s22
      %p389 = scmp.lt.s32.totalorder %s22, 3
      %p390 = pnand %p388, %p389
      %p391 = pneg %p390
      // Predicated region
      $region69: #{tpu_custom_call.1} parent=5 // pred_check
        _
      $region70: #{tpu_custom_call.1} parent=5 // pred_check_branch
        %393 = sbr.rel (%p390) target = $region72
      $region71: #{tpu_custom_call.1} parent=5 // pred_region
        %s394 = ssub.s32 %s22, 1
        %p395 = scmp.lt.s32.totalorder %s27, 1
        %s396 = scalar_select %p395, %s27, 1
        %s397 = smul.addr %s396, 8
        %s398 = scalar_lea.vmem %s0, %s397
        %p399 = pneg %p48
        %p400 = pneg %p45
        %p401 = pneg %p69
        %p402 = pneg %p66
        %p403 = pneg %p90
        %p404 = pneg %p87
        %p405 = pneg %p111
        %p406 = pneg %p108
        %p407 = pneg %p132
        %p408 = pneg %p129
        %p409 = pneg %p153
        %p410 = pneg %p150
        %p411 = pneg %p174
        %p412 = pneg %p171
        %p413 = pneg %p195
        %p414 = pneg %p192
        %p415 = pneg %p216
        %p416 = pneg %p213
        %p417 = pneg %p237
        %p418 = pneg %p234
        %p419 = pneg %p258
        %p420 = pneg %p255
        %p421 = pneg %p279
        %p422 = pneg %p276
        %p423 = pneg %p300
        %p424 = pneg %p297
        %p425 = pneg %p326
        %p426 = pneg %p323
        %s427 = sand.u32 %s313, 1
        %s428 = scalar_lea.sflag [#allocation3], %s427
        %s429 = sand.u32 %s313, 1
        %s430 = smul.addr %s429, 8
        %s431 = scalar_lea.vmem [#allocation2], %s430
        %p432 = scmp.lt.s32.totalorder %s27, 1
        %s433 = scalar_select %p432, %s27, 1
        %s434 = smul.addr %s433, 8
        %s435 = scalar_lea.vmem %s0, %s434
        %v437 = vld [vmem:[%s435] sm:$0xff]
        %v438 = vld [vmem:[%s1] sm:$0x1]
        %v439 = vld [vmem:[%s2] sm:$0x1]
        %vm440 = vcmask 261120
        %v441 = vsel %vm440, %v437, 0.0
        %442 = vadd.xlane.f32.xlu0 %v441
        %v443 = vpop.xlane.xlu0 %442
        %v444 = vrcp.pop 32.0
        %v445 = vmul.f32 %v443, %v444
        %v446 = vsub.f32 %v437, %v445
        %v447 = vmul.f32 %v446, %v446
        %v448 = vsel %vm440, %v447, 0.0
        %449 = vadd.xlane.f32.xlu0 %v448
        %v450 = vpop.xlane.xlu0 %449
        %v451 = vmul.f32 %v450, %v444
        %v452 = vadd.f32 %v451, 1e-06
        %v453 = vrsqrt.pop %v452
        %v454 = vmul.f32 %v446, %v453
        %v456 = vlaneseq
        %v457 = vshrl.u32 %v456, 7
        %v458 = vsub.s32 0, %v457
        %v459 = vrot.slane %v438, %v458
        %v461 = vmul.f32 %v454, %v459
        %v463 = vlaneseq
        %v464 = vshrl.u32 %v463, 7
        %v465 = vsub.s32 0, %v464
        %v466 = vrot.slane %v439, %v465
        %v468 = vadd.f32 %v461, %v466
        %v469 = vpack.c.bf16 %v468, %v468
        %v470 = vld [vmem:[%s3] sm:$0xff]
        %v471 = vld [vmem:[%s3 + $0x8] sm:$0xff]
        %v472 = vld [vmem:[%s3 + $0x10] sm:$0xff]
        %v473 = vld [vmem:[%s3 + $0x18] sm:$0xff]
        %v474 = vld [vmem:[%s4] sm:$0x3]
        %v476 = vlaneseq
        %v477 = vshrl.u32 %v476, 7
        %v478 = vsub.s32 0, %v477
        %v479 = vrot.slane %v474, %v478
        %v480 = vlaneseq
        %v481 = vshrl.u32 %v480, 7
        %v482 = vsub.s32 1, %v481
        %v483 = vrot.slane %v474, %v482
        %v490 = vunpack.c.l.b16 %v470
        %v491 = vunpack.c.h.b16 %v470
        %v492 = vunpack.c.l.b16 %v471
        %v493 = vunpack.c.h.b16 %v471
        %v494 = vunpack.c.l.b16 %v472
        %v495 = vunpack.c.h.b16 %v472
        %v496 = vunpack.c.l.b16 %v473
        %v497 = vunpack.c.h.b16 %v473
        %v498 = vpack.c.b16 %v492, %v490
        %v499 = vpack.c.b16 %v493, %v491
        %v500 = vpack.c.b16 %v496, %v494
        %v501 = vpack.c.b16 %v497, %v495
        %v507 = vsel %vm440, %v469, 0
        %509 = vmatprep.subr.bf16.mxu0 %v499
        %510 = vmatpush1.bf16.msra.mxu0 %v498
        %511 = vmatprep.subr.bf16.mxu0 %v501
        %512 = vmatpush1.bf16.msra.mxu0 %v500
        %513 = vmatprep.subr.bf16.mxu0 0
        %514 = vmatpush1.bf16.msra.mxu0 0
        %515 = vmatprep.subr.bf16.mxu0 0
        %516 = vmatpush1.bf16.msra.mxu0 0
        %517 = vmatprep.subr.bf16.mxu0 0
        %518 = vmatpush1.bf16.msra.mxu0 0
        %519 = vmatprep.subr.bf16.mxu0 0
        %520 = vmatpush1.bf16.msra.mxu0 0
        %521 = vmatprep.subr.bf16.mxu0 0
        %522 = vmatpush1.bf16.msra.mxu0 0
        %523 = vmatprep.subr.bf16.mxu0 0
        %524 = vmatpush1.bf16.msra.mxu0 0
        %525 = vmatprep.subr.bf16.mxu0 0
        %526 = vmatpush1.bf16.msra.mxu0 0
        %527 = vmatprep.subr.bf16.mxu0 0
        %528 = vmatpush1.bf16.msra.mxu0 0
        %529 = vmatprep.subr.bf16.mxu0 0
        %530 = vmatpush1.bf16.msra.mxu0 0
        %531 = vmatprep.subr.bf16.mxu0 0
        %532 = vmatpush1.bf16.msra.mxu0 0
        %533 = vmatprep.subr.bf16.mxu0 0
        %534 = vmatpush1.bf16.msra.mxu0 0
        %535 = vmatprep.subr.bf16.mxu0 0
        %536 = vmatpush1.bf16.msra.mxu0 0
        %537 = vmatprep.subr.bf16.mxu0 0
        %538 = vmatpush1.bf16.msra.mxu0 0
        %539 = vmatprep.subr.bf16.mxu0 0
        %540 = vmatpush1.bf16.msra.mxu0 0
        %541 = vmatprep.mubr.bf16.mxu0 0
        %542 = vmatmul.mubr.bf16.gmra.mrb[0].mxu0 %v507
        %v543 = vpop.f32.mrb[0].mxu0
        %v544 = vadd.f32 %v479, %v543
        %v545 = vpop.f32.mrb[0].mxu0
        %v546 = vadd.f32 %v483, %v545
        %v547 = vpop.f32.mrb[0].mxu0
        %v548 = vpop.f32.mrb[0].mxu0
        %549 = vdwg.mxu0
        %v550 = vmul.f32 %v544, 0.25
        %v551 = vpack.c.bf16 %v550, %v550
        %v552 = vpack.c.bf16 %v544, %v544
        %v553 = vpack.c.bf16 %v546, %v546
        %555 = vrot.lane.b32.xlu0 %v552, 64
        %v556 = vpop.permute.xlu0 %555
        %vm557 = vcmask 130048
        %v559 = vsel %vm557, %v551, 0
        %v562 = vsel %vm557, %v556, 0
        %564 = vmatprep.subr.bf16.mxu0 0
        %565 = vmatpush1.bf16.xpose.msra.mxu0 %v562
        %566 = vmatprep.subr.bf16.mxu0 0
        %567 = vmatpush1.bf16.xpose.msra.mxu0 0
        %568 = vmatprep.subr.bf16.mxu0 0
        %569 = vmatpush1.bf16.xpose.msra.mxu0 0
        %570 = vmatprep.subr.bf16.mxu0 0
        %571 = vmatpush1.bf16.xpose.msra.mxu0 0
        %572 = vmatprep.subr.bf16.mxu0 0
        %573 = vmatpush1.bf16.xpose.msra.mxu0 0
        %574 = vmatprep.subr.bf16.mxu0 0
        %575 = vmatpush1.bf16.xpose.msra.mxu0 0
        %576 = vmatprep.subr.bf16.mxu0 0
        %577 = vmatpush1.bf16.xpose.msra.mxu0 0
        %578 = vmatprep.subr.bf16.mxu0 0
        %579 = vmatpush1.bf16.xpose.msra.mxu0 0
        %580 = vmatprep.subr.bf16.mxu0 0
        %581 = vmatpush1.bf16.xpose.msra.mxu0 0
        %582 = vmatprep.subr.bf16.mxu0 0
        %583 = vmatpush1.bf16.xpose.msra.mxu0 0
        %584 = vmatprep.subr.bf16.mxu0 0
        %585 = vmatpush1.bf16.xpose.msra.mxu0 0
        %586 = vmatprep.subr.bf16.mxu0 0
        %587 = vmatpush1.bf16.xpose.msra.mxu0 0
        %588 = vmatprep.subr.bf16.mxu0 0
        %589 = vmatpush1.bf16.xpose.msra.mxu0 0
        %590 = vmatprep.subr.bf16.mxu0 0
        %591 = vmatpush1.bf16.xpose.msra.mxu0 0
        %592 = vmatprep.subr.bf16.mxu0 0
        %593 = vmatpush1.bf16.xpose.msra.mxu0 0
        %594 = vmatprep.subr.bf16.mxu0 0
        %595 = vmatpush1.bf16.xpose.msra.mxu0 0
        %596 = vmatprep.mubr.bf16.mxu0 0
        %597 = vmatmul.mubr.bf16.gmra.mrb[0].mxu0 %v559
        %v598 = vpop.f32.mrb[0].mxu0
        %v599 = vadd.f32 0.0, %v598
        %v600 = vpop.f32.mrb[0].mxu0
        %v601 = vpop.f32.mrb[0].mxu0
        %v602 = vpop.f32.mrb[0].mxu0
        %603 = vdwg.mxu0
        %vm604 = vcmask 64512
        %v605 = vsel %vm604, %v599, -inf
        %606 = vmax.xlane.f32.xlu0 %v605
        %v607 = vpop.xlane.xlu0 %606
        %v608 = vsub.f32 %v599, %v607
        %v609 = vmul.f32 %v608, 1.442695
        %v610 = vpow.pop %v609
        %v611 = vsel %vm604, %v610, 0.0
        %612 = vadd.xlane.f32.xlu0 %v611
        %v613 = vpop.xlane.xlu0 %612
        %v614 = vrcp.pop %v613
        %v615 = vmul.f32 %v610, %v614
        %v616 = vpack.c.bf16 %v615, %v615
        %v618 = vsel %vm604, %v616, 0
        %vm620 = vcmask 1043456
        %v622 = vsel %vm620, %v553, 0
        %624 = vmatprep.subr.bf16.mxu0 0
        %625 = vmatpush1.bf16.msra.mxu0 %v622
        %626 = vmatprep.subr.bf16.mxu0 0
        %627 = vmatpush1.bf16.msra.mxu0 0
        %628 = vmatprep.subr.bf16.mxu0 0
        %629 = vmatpush1.bf16.msra.mxu0 0
        %630 = vmatprep.subr.bf16.mxu0 0
        %631 = vmatpush1.bf16.msra.mxu0 0
        %632 = vmatprep.subr.bf16.mxu0 0
        %633 = vmatpush1.bf16.msra.mxu0 0
        %634 = vmatprep.subr.bf16.mxu0 0
        %635 = vmatpush1.bf16.msra.mxu0 0
        %636 = vmatprep.subr.bf16.mxu0 0
        %637 = vmatpush1.bf16.msra.mxu0 0
        %638 = vmatprep.subr.bf16.mxu0 0
        %639 = vmatpush1.bf16.msra.mxu0 0
        %640 = vmatprep.subr.bf16.mxu0 0
        %641 = vmatpush1.bf16.msra.mxu0 0
        %642 = vmatprep.subr.bf16.mxu0 0
        %643 = vmatpush1.bf16.msra.mxu0 0
        %644 = vmatprep.subr.bf16.mxu0 0
        %645 = vmatpush1.bf16.msra.mxu0 0
        %646 = vmatprep.subr.bf16.mxu0 0
        %647 = vmatpush1.bf16.msra.mxu0 0
        %648 = vmatprep.subr.bf16.mxu0 0
        %649 = vmatpush1.bf16.msra.mxu0 0
        %650 = vmatprep.subr.bf16.mxu0 0
        %651 = vmatpush1.bf16.msra.mxu0 0
        %652 = vmatprep.subr.bf16.mxu0 0
        %653 = vmatpush1.bf16.msra.mxu0 0
        %654 = vmatprep.subr.bf16.mxu0 0
        %655 = vmatpush1.bf16.msra.mxu0 0
        %656 = vmatprep.mubr.bf16.mxu0 0
        %657 = vmatmul.mubr.bf16.gmra.mrb[0].mxu0 %v618
        %v658 = vpop.f32.mrb[0].mxu0
        %v659 = vadd.f32 0.0, %v658
        %v660 = vpop.f32.mrb[0].mxu0
        %v661 = vpop.f32.mrb[0].mxu0
        %v662 = vpop.f32.mrb[0].mxu0
        %663 = vdwg.mxu0
        %v664 = vpack.c.bf16 %v659, %v659
        %666 = vrot.lane.b32.xlu0 %v551, 112
        %v667 = vpop.permute.xlu0 %666
        %668 = vrot.lane.b32.xlu0 %v552, 48
        %v669 = vpop.permute.xlu0 %668
        %v671 = vsel %vm557, %v667, 0
        %v674 = vsel %vm557, %v669, 0
        %676 = vmatprep.subr.bf16.mxu0 0
        %677 = vmatpush1.bf16.xpose.msra.mxu0 %v674
        %678 = vmatprep.subr.bf16.mxu0 0
        %679 = vmatpush1.bf16.xpose.msra.mxu0 0
        %680 = vmatprep.subr.bf16.mxu0 0
        %681 = vmatpush1.bf16.xpose.msra.mxu0 0
        %682 = vmatprep.subr.bf16.mxu0 0
        %683 = vmatpush1.bf16.xpose.msra.mxu0 0
        %684 = vmatprep.subr.bf16.mxu0 0
        %685 = vmatpush1.bf16.xpose.msra.mxu0 0
        %686 = vmatprep.subr.bf16.mxu0 0
        %687 = vmatpush1.bf16.xpose.msra.mxu0 0
        %688 = vmatprep.subr.bf16.mxu0 0
        %689 = vmatpush1.bf16.xpose.msra.mxu0 0
        %690 = vmatprep.subr.bf16.mxu0 0
        %691 = vmatpush1.bf16.xpose.msra.mxu0 0
        %692 = vmatprep.subr.bf16.mxu0 0
        %693 = vmatpush1.bf16.xpose.msra.mxu0 0
        %694 = vmatprep.subr.bf16.mxu0 0
        %695 = vmatpush1.bf16.xpose.msra.mxu0 0
        %696 = vmatprep.subr.bf16.mxu0 0
        %697 = vmatpush1.bf16.xpose.msra.mxu0 0
        %698 = vmatprep.subr.bf16.mxu0 0
        %699 = vmatpush1.bf16.xpose.msra.mxu0 0
        %700 = vmatprep.subr.bf16.mxu0 0
        %701 = vmatpush1.bf16.xpose.msra.mxu0 0
        %702 = vmatprep.subr.bf16.mxu0 0
        %703 = vmatpush1.bf16.xpose.msra.mxu0 0
        %704 = vmatprep.subr.bf16.mxu0 0
        %705 = vmatpush1.bf16.xpose.msra.mxu0 0
        %706 = vmatprep.subr.bf16.mxu0 0
        %707 = vmatpush1.bf16.xpose.msra.mxu0 0
        %708 = vmatprep.mubr.bf16.mxu0 0
        %709 = vmatmul.mubr.bf16.gmra.mrb[0].mxu0 %v671
        %v710 = vpop.f32.mrb[0].mxu0
        %v711 = vadd.f32 0.0, %v710
        %v712 = vpop.f32.mrb[0].mxu0
        %v713 = vpop.f32.mrb[0].mxu0
        %v714 = vpop.f32.mrb[0].mxu0
        %715 = vdwg.mxu0
        %v716 = vsel %vm604, %v711, -inf
        %717 = vmax.xlane.f32.xlu0 %v716
        %v718 = vpop.xlane.xlu0 %717
        %v719 = vsub.f32 %v711, %v718
        %v720 = vmul.f32 %v719, 1.442695
        %v721 = vpow.pop %v720
        %v722 = vsel %vm604, %v721, 0.0
        %723 = vadd.xlane.f32.xlu0 %v722
        %v724 = vpop.xlane.xlu0 %723
        %v725 = vrcp.pop %v724
        %v726 = vmul.f32 %v721, %v725
        %v727 = vpack.c.bf16 %v726, %v726
        %729 = vrot.lane.b32.xlu0 %v553, 112
        %v730 = vpop.permute.xlu0 %729
        %v732 = vsel %vm604, %v727, 0
        %v735 = vsel %vm620, %v730, 0
        %737 = vmatprep.subr.bf16.mxu0 0
        %738 = vmatpush1.bf16.msra.mxu0 %v735
        %739 = vmatprep.subr.bf16.mxu0 0
        %740 = vmatpush1.bf16.msra.mxu0 0
        %741 = vmatprep.subr.bf16.mxu0 0
        %742 = vmatpush1.bf16.msra.mxu0 0
        %743 = vmatprep.subr.bf16.mxu0 0
        %744 = vmatpush1.bf16.msra.mxu0 0
        %745 = vmatprep.subr.bf16.mxu0 0
        %746 = vmatpush1.bf16.msra.mxu0 0
        %747 = vmatprep.subr.bf16.mxu0 0
        %748 = vmatpush1.bf16.msra.mxu0 0
        %749 = vmatprep.subr.bf16.mxu0 0
        %750 = vmatpush1.bf16.msra.mxu0 0
        %751 = vmatprep.subr.bf16.mxu0 0
        %752 = vmatpush1.bf16.msra.mxu0 0
        %753 = vmatprep.subr.bf16.mxu0 0
        %754 = vmatpush1.bf16.msra.mxu0 0
        %755 = vmatprep.subr.bf16.mxu0 0
        %756 = vmatpush1.bf16.msra.mxu0 0
        %757 = vmatprep.subr.bf16.mxu0 0
        %758 = vmatpush1.bf16.msra.mxu0 0
        %759 = vmatprep.subr.bf16.mxu0 0
        %760 = vmatpush1.bf16.msra.mxu0 0
        %761 = vmatprep.subr.bf16.mxu0 0
        %762 = vmatpush1.bf16.msra.mxu0 0
        %763 = vmatprep.subr.bf16.mxu0 0
        %764 = vmatpush1.bf16.msra.mxu0 0
        %765 = vmatprep.subr.bf16.mxu0 0
        %766 = vmatpush1.bf16.msra.mxu0 0
        %767 = vmatprep.subr.bf16.mxu0 0
        %768 = vmatpush1.bf16.msra.mxu0 0
        %769 = vmatprep.mubr.bf16.mxu0 0
        %770 = vmatmul.mubr.bf16.gmra.mrb[0].mxu0 %v732
        %v771 = vpop.f32.mrb[0].mxu0
        %v772 = vadd.f32 0.0, %v771
        %v773 = vpop.f32.mrb[0].mxu0
        %v774 = vpop.f32.mrb[0].mxu0
        %v775 = vpop.f32.mrb[0].mxu0
        %776 = vdwg.mxu0
        %v777 = vpack.c.bf16 %v772, %v772
        %778 = vrot.lane.b32.xlu0 %v551, 96
        %v779 = vpop.permute.xlu0 %778
        %780 = vrot.lane.b32.xlu0 %v552, 32
        %v781 = vpop.permute.xlu0 %780
        %v783 = vsel %vm557, %v779, 0
        %v786 = vsel %vm557, %v781, 0
        %788 = vmatprep.subr.bf16.mxu0 0
        %789 = vmatpush1.bf16.xpose.msra.mxu0 %v786
        %790 = vmatprep.subr.bf16.mxu0 0
        %791 = vmatpush1.bf16.xpose.msra.mxu0 0
        %792 = vmatprep.subr.bf16.mxu0 0
        %793 = vmatpush1.bf16.xpose.msra.mxu0 0
        %794 = vmatprep.subr.bf16.mxu0 0
        %795 = vmatpush1.bf16.xpose.msra.mxu0 0
        %796 = vmatprep.subr.bf16.mxu0 0
        %797 = vmatpush1.bf16.xpose.msra.mxu0 0
        %798 = vmatprep.subr.bf16.mxu0 0
        %799 = vmatpush1.bf16.xpose.msra.mxu0 0
        %800 = vmatprep.subr.bf16.mxu0 0
        %801 = vmatpush1.bf16.xpose.msra.mxu0 0
        %802 = vmatprep.subr.bf16.mxu0 0
        %803 = vmatpush1.bf16.xpose.msra.mxu0 0
        %804 = vmatprep.subr.bf16.mxu0 0
        %805 = vmatpush1.bf16.xpose.msra.mxu0 0
        %806 = vmatprep.subr.bf16.mxu0 0
        %807 = vmatpush1.bf16.xpose.msra.mxu0 0
        %808 = vmatprep.subr.bf16.mxu0 0
        %809 = vmatpush1.bf16.xpose.msra.mxu0 0
        %810 = vmatprep.subr.bf16.mxu0 0
        %811 = vmatpush1.bf16.xpose.msra.mxu0 0
        %812 = vmatprep.subr.bf16.mxu0 0
        %813 = vmatpush1.bf16.xpose.msra.mxu0 0
        %814 = vmatprep.subr.bf16.mxu0 0
        %815 = vmatpush1.bf16.xpose.msra.mxu0 0
        %816 = vmatprep.subr.bf16.mxu0 0
        %817 = vmatpush1.bf16.xpose.msra.mxu0 0
        %818 = vmatprep.subr.bf16.mxu0 0
        %819 = vmatpush1.bf16.xpose.msra.mxu0 0
        %820 = vmatprep.mubr.bf16.mxu0 0
        %821 = vmatmul.mubr.bf16.gmra.mrb[0].mxu0 %v783
        %v822 = vpop.f32.mrb[0].mxu0
        %v823 = vadd.f32 0.0, %v822
        %v824 = vpop.f32.mrb[0].mxu0
        %v825 = vpop.f32.mrb[0].mxu0
        %v826 = vpop.f32.mrb[0].mxu0
        %827 = vdwg.mxu0
        %v828 = vsel %vm604, %v823, -inf
        %829 = vmax.xlane.f32.xlu0 %v828
        %v830 = vpop.xlane.xlu0 %829
        %v831 = vsub.f32 %v823, %v830
        %v832 = vmul.f32 %v831, 1.442695
        %v833 = vpow.pop %v832
        %v834 = vsel %vm604, %v833, 0.0
        %835 = vadd.xlane.f32.xlu0 %v834
        %v836 = vpop.xlane.xlu0 %835
        %v837 = vrcp.pop %v836
        %v838 = vmul.f32 %v833, %v837
        %v839 = vpack.c.bf16 %v838, %v838
        %840 = vrot.lane.b32.xlu0 %v553, 96
        %v841 = vpop.permute.xlu0 %840
        %v843 = vsel %vm604, %v839, 0
        %v846 = vsel %vm620, %v841, 0
        %848 = vmatprep.subr.bf16.mxu0 0
        %849 = vmatpush1.bf16.msra.mxu0 %v846
        %850 = vmatprep.subr.bf16.mxu0 0
        %851 = vmatpush1.bf16.msra.mxu0 0
        %852 = vmatprep.subr.bf16.mxu0 0
        %853 = vmatpush1.bf16.msra.mxu0 0
        %854 = vmatprep.subr.bf16.mxu0 0
        %855 = vmatpush1.bf16.msra.mxu0 0
        %856 = vmatprep.subr.bf16.mxu0 0
        %857 = vmatpush1.bf16.msra.mxu0 0
        %858 = vmatprep.subr.bf16.mxu0 0
        %859 = vmatpush1.bf16.msra.mxu0 0
        %860 = vmatprep.subr.bf16.mxu0 0
        %861 = vmatpush1.bf16.msra.mxu0 0
        %862 = vmatprep.subr.bf16.mxu0 0
        %863 = vmatpush1.bf16.msra.mxu0 0
        %864 = vmatprep.subr.bf16.mxu0 0
        %865 = vmatpush1.bf16.msra.mxu0 0
        %866 = vmatprep.subr.bf16.mxu0 0
        %867 = vmatpush1.bf16.msra.mxu0 0
        %868 = vmatprep.subr.bf16.mxu0 0
        %869 = vmatpush1.bf16.msra.mxu0 0
        %870 = vmatprep.subr.bf16.mxu0 0
        %871 = vmatpush1.bf16.msra.mxu0 0
        %872 = vmatprep.subr.bf16.mxu0 0
        %873 = vmatpush1.bf16.msra.mxu0 0
        %874 = vmatprep.subr.bf16.mxu0 0
        %875 = vmatpush1.bf16.msra.mxu0 0
        %876 = vmatprep.subr.bf16.mxu0 0
        %877 = vmatpush1.bf16.msra.mxu0 0
        %878 = vmatprep.subr.bf16.mxu0 0
        %879 = vmatpush1.bf16.msra.mxu0 0
        %880 = vmatprep.mubr.bf16.mxu0 0
        %881 = vmatmul.mubr.bf16.gmra.mrb[0].mxu0 %v843
        %v882 = vpop.f32.mrb[0].mxu0
        %v883 = vadd.f32 0.0, %v882
        %v884 = vpop.f32.mrb[0].mxu0
        %v885 = vpop.f32.mrb[0].mxu0
        %v886 = vpop.f32.mrb[0].mxu0
        %887 = vdwg.mxu0
        %v888 = vpack.c.bf16 %v883, %v883
        %889 = vrot.lane.b32.xlu0 %v551, 80
        %v890 = vpop.permute.xlu0 %889
        %891 = vrot.lane.b32.xlu0 %v552, 16
        %v892 = vpop.permute.xlu0 %891
        %v894 = vsel %vm557, %v890, 0
        %v897 = vsel %vm557, %v892, 0
        %899 = vmatprep.subr.bf16.mxu0 0
        %900 = vmatpush1.bf16.xpose.msra.mxu0 %v897
        %901 = vmatprep.subr.bf16.mxu0 0
        %902 = vmatpush1.bf16.xpose.msra.mxu0 0
        %903 = vmatprep.subr.bf16.mxu0 0
        %904 = vmatpush1.bf16.xpose.msra.mxu0 0
        %905 = vmatprep.subr.bf16.mxu0 0
        %906 = vmatpush1.bf16.xpose.msra.mxu0 0
        %907 = vmatprep.subr.bf16.mxu0 0
        %908 = vmatpush1.bf16.xpose.msra.mxu0 0
        %909 = vmatprep.subr.bf16.mxu0 0
        %910 = vmatpush1.bf16.xpose.msra.mxu0 0
        %911 = vmatprep.subr.bf16.mxu0 0
        %912 = vmatpush1.bf16.xpose.msra.mxu0 0
        %913 = vmatprep.subr.bf16.mxu0 0
        %914 = vmatpush1.bf16.xpose.msra.mxu0 0
        %915 = vmatprep.subr.bf16.mxu0 0
        %916 = vmatpush1.bf16.xpose.msra.mxu0 0
        %917 = vmatprep.subr.bf16.mxu0 0
        %918 = vmatpush1.bf16.xpose.msra.mxu0 0
        %919 = vmatprep.subr.bf16.mxu0 0
        %920 = vmatpush1.bf16.xpose.msra.mxu0 0
        %921 = vmatprep.subr.bf16.mxu0 0
        %922 = vmatpush1.bf16.xpose.msra.mxu0 0
        %923 = vmatprep.subr.bf16.mxu0 0
        %924 = vmatpush1.bf16.xpose.msra.mxu0 0
        %925 = vmatprep.subr.bf16.mxu0 0
        %926 = vmatpush1.bf16.xpose.msra.mxu0 0
        %927 = vmatprep.subr.bf16.mxu0 0
        %928 = vmatpush1.bf16.xpose.msra.mxu0 0
        %929 = vmatprep.subr.bf16.mxu0 0
        %930 = vmatpush1.bf16.xpose.msra.mxu0 0
        %931 = vmatprep.mubr.bf16.mxu0 0
        %932 = vmatmul.mubr.bf16.gmra.mrb[0].mxu0 %v894
        %v933 = vpop.f32.mrb[0].mxu0
        %v934 = vadd.f32 0.0, %v933
        %v935 = vpop.f32.mrb[0].mxu0
        %v936 = vpop.f32.mrb[0].mxu0
        %v937 = vpop.f32.mrb[0].mxu0
        %938 = vdwg.mxu0
        %v939 = vsel %vm604, %v934, -inf
        %940 = vmax.xlane.f32.xlu0 %v939
        %v941 = vpop.xlane.xlu0 %940
        %v942 = vsub.f32 %v934, %v941
        %v943 = vmul.f32 %v942, 1.442695
        %v944 = vpow.pop %v943
        %v945 = vsel %vm604, %v944, 0.0
        %946 = vadd.xlane.f32.xlu0 %v945
        %v947 = vpop.xlane.xlu0 %946
        %v948 = vrcp.pop %v947
        %v949 = vmul.f32 %v944, %v948
        %v950 = vpack.c.bf16 %v949, %v949
        %951 = vrot.lane.b32.xlu0 %v553, 80
        %v952 = vpop.permute.xlu0 %951
        %v954 = vsel %vm604, %v950, 0
        %v957 = vsel %vm620, %v952, 0
        %959 = vmatprep.subr.bf16.mxu0 0
        %960 = vmatpush1.bf16.msra.mxu0 %v957
        %961 = vmatprep.subr.bf16.mxu0 0
        %962 = vmatpush1.bf16.msra.mxu0 0
        %963 = vmatprep.subr.bf16.mxu0 0
        %964 = vmatpush1.bf16.msra.mxu0 0
        %965 = vmatprep.subr.bf16.mxu0 0
        %966 = vmatpush1.bf16.msra.mxu0 0
        %967 = vmatprep.subr.bf16.mxu0 0
        %968 = vmatpush1.bf16.msra.mxu0 0
        %969 = vmatprep.subr.bf16.mxu0 0
        %970 = vmatpush1.bf16.msra.mxu0 0
        %971 = vmatprep.subr.bf16.mxu0 0
        %972 = vmatpush1.bf16.msra.mxu0 0
        %973 = vmatprep.subr.bf16.mxu0 0
        %974 = vmatpush1.bf16.msra.mxu0 0
        %975 = vmatprep.subr.bf16.mxu0 0
        %976 = vmatpush1.bf16.msra.mxu0 0
        %977 = vmatprep.subr.bf16.mxu0 0
        %978 = vmatpush1.bf16.msra.mxu0 0
        %979 = vmatprep.subr.bf16.mxu0 0
        %980 = vmatpush1.bf16.msra.mxu0 0
        %981 = vmatprep.subr.bf16.mxu0 0
        %982 = vmatpush1.bf16.msra.mxu0 0
        %983 = vmatprep.subr.bf16.mxu0 0
        %984 = vmatpush1.bf16.msra.mxu0 0
        %985 = vmatprep.subr.bf16.mxu0 0
        %986 = vmatpush1.bf16.msra.mxu0 0
        %987 = vmatprep.subr.bf16.mxu0 0
        %988 = vmatpush1.bf16.msra.mxu0 0
        %989 = vmatprep.subr.bf16.mxu0 0
        %990 = vmatpush1.bf16.msra.mxu0 0
        %991 = vmatprep.mubr.bf16.mxu0 0
        %992 = vmatmul.mubr.bf16.gmra.mrb[0].mxu0 %v954
        %v993 = vpop.f32.mrb[0].mxu0
        %v994 = vadd.f32 0.0, %v993
        %v995 = vpop.f32.mrb[0].mxu0
        %v996 = vpop.f32.mrb[0].mxu0
        %v997 = vpop.f32.mrb[0].mxu0
        %998 = vdwg.mxu0
        %v999 = vpack.c.bf16 %v994, %v994
        %1001 = vrot.lane.b32.xlu0 %v777, 16
        %v1002 = vpop.permute.xlu0 %1001
        %1004 = vrot.lane.b32.xlu0 %v888, 32
        %v1005 = vpop.permute.xlu0 %1004
        %1007 = vrot.lane.b32.xlu0 %v999, 48
        %v1008 = vpop.permute.xlu0 %1007
        %v1011 = vsel %vm557, %v664, %v1002
        %v1013 = vsel %vm440, %v1011, %v1005
        %vm1014 = vcmask 392192
        %v1016 = vsel %vm1014, %v1013, %v1008
        %v1017 = vld [vmem:[%s5] sm:$0xf]
        %v1018 = vld [vmem:[%s5 + $0x4] sm:$0xf]
        %v1019 = vld [vmem:[%s5 + $0x8] sm:$0xf]
        %v1020 = vld [vmem:[%s5 + $0xc] sm:$0xf]
        %v1021 = vld [vmem:[%s5 + $0x10] sm:$0xf]
        %v1022 = vld [vmem:[%s5 + $0x14] sm:$0xf]
        %v1023 = vld [vmem:[%s5 + $0x18] sm:$0xf]
        %v1024 = vld [vmem:[%s5 + $0x1c] sm:$0xf]
        %v1025 = vld [vmem:[%s6] sm:$0x1]
        %v1027 = vlaneseq
        %v1028 = vshrl.u32 %v1027, 7
        %v1029 = vsub.s32 0, %v1028
        %v1030 = vrot.slane %v1025, %v1029
        %v1040 = vunpack.c.l.b16 %v1017
        %v1041 = vunpack.c.l.b16 %v1018
        %v1042 = vunpack.c.l.b16 %v1019
        %v1043 = vunpack.c.l.b16 %v1020
        %v1044 = vunpack.c.l.b16 %v1021
        %v1045 = vunpack.c.l.b16 %v1022
        %v1046 = vunpack.c.l.b16 %v1023
        %v1047 = vunpack.c.l.b16 %v1024
        %v1048 = vpack.c.b16 %v1041, %v1040
        %v1049 = vpack.c.b16 %v1043, %v1042
        %v1050 = vpack.c.b16 %v1045, %v1044
        %v1051 = vpack.c.b16 %v1047, %v1046
        %vm1056 = vcmask 523264
        %v1057 = vsel %vm1056, %v1016, 0
        %1059 = vmatprep.subr.bf16.mxu0 0
        %1060 = vmatpush1.bf16.msra.mxu0 %v1048
        %1061 = vmatprep.subr.bf16.mxu0 0
        %1062 = vmatpush1.bf16.msra.mxu0 %v1049
        %1063 = vmatprep.subr.bf16.mxu0 0
        %1064 = vmatpush1.bf16.msra.mxu0 %v1050
        %1065 = vmatprep.subr.bf16.mxu0 0
        %1066 = vmatpush1.bf16.msra.mxu0 %v1051
        %1067 = vmatprep.subr.bf16.mxu0 0
        %1068 = vmatpush1.bf16.msra.mxu0 0
        %1069 = vmatprep.subr.bf16.mxu0 0
        %1070 = vmatpush1.bf16.msra.mxu0 0
        %1071 = vmatprep.subr.bf16.mxu0 0
        %1072 = vmatpush1.bf16.msra.mxu0 0
        %1073 = vmatprep.subr.bf16.mxu0 0
        %1074 = vmatpush1.bf16.msra.mxu0 0
        %1075 = vmatprep.subr.bf16.mxu0 0
        %1076 = vmatpush1.bf16.msra.mxu0 0
        %1077 = vmatprep.subr.bf16.mxu0 0
        %1078 = vmatpush1.bf16.msra.mxu0 0
        %1079 = vmatprep.subr.bf16.mxu0 0
        %1080 = vmatpush1.bf16.msra.mxu0 0
        %1081 = vmatprep.subr.bf16.mxu0 0
        %1082 = vmatpush1.bf16.msra.mxu0 0
        %1083 = vmatprep.subr.bf16.mxu0 0
        %1084 = vmatpush1.bf16.msra.mxu0 0
        %1085 = vmatprep.subr.bf16.mxu0 0
        %1086 = vmatpush1.bf16.msra.mxu0 0
        %1087 = vmatprep.subr.bf16.mxu0 0
        %1088 = vmatpush1.bf16.msra.mxu0 0
        %1089 = vmatprep.subr.bf16.mxu0 0
        %1090 = vmatpush1.bf16.msra.mxu0 0
        %1091 = vmatprep.mubr.bf16.mxu0 0
        %1092 = vmatmul.mubr.bf16.gmra.mrb[0].mxu0 %v1057
        %v1093 = vpop.f32.mrb[0].mxu0
        %v1094 = vadd.f32 %v1030, %v1093
        %v1095 = vpop.f32.mrb[0].mxu0
        %v1096 = vpop.f32.mrb[0].mxu0
        %v1097 = vpop.f32.mrb[0].mxu0
        %1098 = vdwg.mxu0
        %v1099 = vadd.f32 %v1094, %v437
        %v1100 = vld [vmem:[%s7] sm:$0x1]
        %v1101 = vld [vmem:[%s8] sm:$0x1]
        %v1102 = vsel %vm440, %v1099, 0.0
        %1103 = vadd.xlane.f32.xlu0 %v1102
        %v1104 = vpop.xlane.xlu0 %1103
        %v1105 = vmul.f32 %v1104, %v444
        %v1106 = vsub.f32 %v1099, %v1105
        %v1107 = vmul.f32 %v1106, %v1106
        %v1108 = vsel %vm440, %v1107, 0.0
        %1109 = vadd.xlane.f32.xlu0 %v1108
        %v1110 = vpop.xlane.xlu0 %1109
        %v1111 = vmul.f32 %v1110, %v444
        %v1112 = vadd.f32 %v1111, 1e-06
        %v1113 = vrsqrt.pop %v1112
        %v1114 = vmul.f32 %v1106, %v1113
        %v1116 = vlaneseq
        %v1117 = vshrl.u32 %v1116, 7
        %v1118 = vsub.s32 0, %v1117
        %v1119 = vrot.slane %v1100, %v1118
        %v1121 = vmul.f32 %v1114, %v1119
        %v1123 = vlaneseq
        %v1124 = vshrl.u32 %v1123, 7
        %v1125 = vsub.s32 0, %v1124
        %v1126 = vrot.slane %v1101, %v1125
        %v1128 = vadd.f32 %v1121, %v1126
        %v1129 = vpack.c.bf16 %v1128, %v1128
        %v1130 = vld [vmem:[%s9] sm:$0xf]
        %v1131 = vld [vmem:[%s9 + $0x4] sm:$0xf]
        %v1132 = vld [vmem:[%s9 + $0x8] sm:$0xf]
        %v1133 = vld [vmem:[%s9 + $0xc] sm:$0xf]
        %v1134 = vld [vmem:[%s10] sm:$0x1]
        %v1136 = vlaneseq
        %v1137 = vshrl.u32 %v1136, 7
        %v1138 = vsub.s32 0, %v1137
        %v1139 = vrot.slane %v1134, %v1138
        %v1145 = vunpack.c.l.b16 %v1130
        %v1146 = vunpack.c.l.b16 %v1131
        %v1147 = vunpack.c.l.b16 %v1132
        %v1148 = vunpack.c.l.b16 %v1133
        %v1149 = vpack.c.b16 %v1146, %v1145
        %v1150 = vpack.c.b16 %v1148, %v1147
        %v1154 = vsel %vm440, %v1129, 0
        %1156 = vmatprep.subr.bf16.mxu0 0
        %1157 = vmatpush1.bf16.msra.mxu0 %v1149
        %1158 = vmatprep.subr.bf16.mxu0 0
        %1159 = vmatpush1.bf16.msra.mxu0 %v1150
        %1160 = vmatprep.subr.bf16.mxu0 0
        %1161 = vmatpush1.bf16.msra.mxu0 0
        %1162 = vmatprep.subr.bf16.mxu0 0
        %1163 = vmatpush1.bf16.msra.mxu0 0
        %1164 = vmatprep.subr.bf16.mxu0 0
        %1165 = vmatpush1.bf16.msra.mxu0 0
        %1166 = vmatprep.subr.bf16.mxu0 0
        %1167 = vmatpush1.bf16.msra.mxu0 0
        %1168 = vmatprep.subr.bf16.mxu0 0
        %1169 = vmatpush1.bf16.msra.mxu0 0
        %1170 = vmatprep.subr.bf16.mxu0 0
        %1171 = vmatpush1.bf16.msra.mxu0 0
        %1172 = vmatprep.subr.bf16.mxu0 0
        %1173 = vmatpush1.bf16.msra.mxu0 0
        %1174 = vmatprep.subr.bf16.mxu0 0
        %1175 = vmatpush1.bf16.msra.mxu0 0
        %1176 = vmatprep.subr.bf16.mxu0 0
        %1177 = vmatpush1.bf16.msra.mxu0 0
        %1178 = vmatprep.subr.bf16.mxu0 0
        %1179 = vmatpush1.bf16.msra.mxu0 0
        %1180 = vmatprep.subr.bf16.mxu0 0
        %1181 = vmatpush1.bf16.msra.mxu0 0
        %1182 = vmatprep.subr.bf16.mxu0 0
        %1183 = vmatpush1.bf16.msra.mxu0 0
        %1184 = vmatprep.subr.bf16.mxu0 0
        %1185 = vmatpush1.bf16.msra.mxu0 0
        %1186 = vmatprep.subr.bf16.mxu0 0
        %1187 = vmatpush1.bf16.msra.mxu0 0
        %1188 = vmatprep.mubr.bf16.mxu0 0
        %1189 = vmatmul.mubr.bf16.gmra.mrb[0].mxu0 %v1154
        %v1190 = vpop.f32.mrb[0].mxu0
        %v1191 = vadd.f32 %v1139, %v1190
        %v1192 = vpop.f32.mrb[0].mxu0
        %v1193 = vpop.f32.mrb[0].mxu0
        %v1194 = vpop.f32.mrb[0].mxu0
        %1195 = vdwg.mxu0
        %v1196 = vmax.f32 %v1191, 0.0
        %v1197 = vpack.c.bf16 %v1196, %v1196
        %v1198 = vld [vmem:[%s11] sm:$0xf]
        %v1199 = vld [vmem:[%s11 + $0x4] sm:$0xf]
        %v1200 = vld [vmem:[%s11 + $0x8] sm:$0xf]
        %v1201 = vld [vmem:[%s11 + $0xc] sm:$0xf]
        %v1202 = vld [vmem:[%s11 + $0x10] sm:$0xf]
        %v1203 = vld [vmem:[%s11 + $0x14] sm:$0xf]
        %v1204 = vld [vmem:[%s11 + $0x18] sm:$0xf]
        %v1205 = vld [vmem:[%s11 + $0x1c] sm:$0xf]
        %v1206 = vld [vmem:[%s12] sm:$0x1]
        %v1208 = vlaneseq
        %v1209 = vshrl.u32 %v1208, 7
        %v1210 = vsub.s32 0, %v1209
        %v1211 = vrot.slane %v1206, %v1210
        %v1221 = vunpack.c.l.b16 %v1198
        %v1222 = vunpack.c.l.b16 %v1199
        %v1223 = vunpack.c.l.b16 %v1200
        %v1224 = vunpack.c.l.b16 %v1201
        %v1225 = vunpack.c.l.b16 %v1202
        %v1226 = vunpack.c.l.b16 %v1203
        %v1227 = vunpack.c.l.b16 %v1204
        %v1228 = vunpack.c.l.b16 %v1205
        %v1229 = vpack.c.b16 %v1222, %v1221
        %v1230 = vpack.c.b16 %v1224, %v1223
        %v1231 = vpack.c.b16 %v1226, %v1225
        %v1232 = vpack.c.b16 %v1228, %v1227
        %v1238 = vsel %vm1056, %v1197, 0
        %1240 = vmatprep.subr.bf16.mxu0 0
        %1241 = vmatpush1.bf16.msra.mxu0 %v1229
        %1242 = vmatprep.subr.bf16.mxu0 0
        %1243 = vmatpush1.bf16.msra.mxu0 %v1230
        %1244 = vmatprep.subr.bf16.mxu0 0
        %1245 = vmatpush1.bf16.msra.mxu0 %v1231
        %1246 = vmatprep.subr.bf16.mxu0 0
        %1247 = vmatpush1.bf16.msra.mxu0 %v1232
        %1248 = vmatprep.subr.bf16.mxu0 0
        %1249 = vmatpush1.bf16.msra.mxu0 0
        %1250 = vmatprep.subr.bf16.mxu0 0
        %1251 = vmatpush1.bf16.msra.mxu0 0
        %1252 = vmatprep.subr.bf16.mxu0 0
        %1253 = vmatpush1.bf16.msra.mxu0 0
        %1254 = vmatprep.subr.bf16.mxu0 0
        %1255 = vmatpush1.bf16.msra.mxu0 0
        %1256 = vmatprep.subr.bf16.mxu0 0
        %1257 = vmatpush1.bf16.msra.mxu0 0
        %1258 = vmatprep.subr.bf16.mxu0 0
        %1259 = vmatpush1.bf16.msra.mxu0 0
        %1260 = vmatprep.subr.bf16.mxu0 0
        %1261 = vmatpush1.bf16.msra.mxu0 0
        %1262 = vmatprep.subr.bf16.mxu0 0
        %1263 = vmatpush1.bf16.msra.mxu0 0
        %1264 = vmatprep.subr.bf16.mxu0 0
        %1265 = vmatpush1.bf16.msra.mxu0 0
        %1266 = vmatprep.subr.bf16.mxu0 0
        %1267 = vmatpush1.bf16.msra.mxu0 0
        %1268 = vmatprep.subr.bf16.mxu0 0
        %1269 = vmatpush1.bf16.msra.mxu0 0
        %1270 = vmatprep.subr.bf16.mxu0 0
        %1271 = vmatpush1.bf16.msra.mxu0 0
        %1272 = vmatprep.mubr.bf16.mxu0 0
        %1273 = vmatmul.mubr.bf16.gmra.mrb[0].mxu0 %v1238
        %v1274 = vpop.f32.mrb[0].mxu0
        %v1275 = vadd.f32 %v1211, %v1274
        %v1276 = vpop.f32.mrb[0].mxu0
        %v1277 = vpop.f32.mrb[0].mxu0
        %v1278 = vpop.f32.mrb[0].mxu0
        %1279 = vdwg.mxu0
        %v1280 = vadd.f32 %v1275, %v1099
        %1281 = vst.msk [vmem:[%s431] sm:$0xff] %vm440, %v1280
        %s1282 = sand.u32 %s313, 1
        %s1283 = scalar_lea.sflag [#allocation3], %s1282
        %s1284 = sand.u32 %s313, 1
        %s1285 = smul.addr %s1284, 8
        %s1286 = scalar_lea.vmem [#allocation2], %s1285
        // Predicated region
        $region73: #{tpu_custom_call.1} parent=71 // pred_check
          %p1287 = pneg %p323
        $region74: #{tpu_custom_call.1} parent=71 // pred_check_branch
          %1289 = sbr.rel (%p1287) target = $region76
        $region75: #{tpu_custom_call.1} parent=71 // pred_region
          %s1291 = ssub.s32 128, 128
          %1292 = vsyncadd %s1283, %s1291
          %s1293 = smul.addr %s27, 128
          %s1294 = scalar_lea.hbm %s13, %s1293
          %s1296 = sshll.u32 %s1286, 4
          %s1297 = int_to_ptr.vmem [resolvable:$true] %s1296
          %1299 = dma.vmem_to_hbm [thread:$0]  %s1297, 128, %s1294, %s1283
        $region76: #{tpu_custom_call.1} parent=71 // pred_fallthru
          _
      $region72: #{tpu_custom_call.1} parent=5 // pred_fallthru
        _
      %p1300 = scmp.le.s32.totalorder 2, %s22
      // Predicated region
      $region77: #{tpu_custom_call.1} parent=5 // pred_check
        %p1301 = pneg %p1300
      $region78: #{tpu_custom_call.1} parent=5 // pred_check_branch
        %1303 = sbr.rel (%p1301) target = $region80
      $region79: #{tpu_custom_call.1} parent=5 // pred_region
        %s1304 = ssub.s32 %s22, 2
        // Predicated region
        $region81: #{tpu_custom_call.1} parent=79 // pred_check
          %p1305 = pneg %p329
        $region82: #{tpu_custom_call.1} parent=79 // pred_check_branch
          %1307 = sbr.rel (%p1305) target = $region84
        $region83: #{tpu_custom_call.1} parent=79 // pred_region
          %s1308 = sand.u32 %s314, 1
          %s1309 = scalar_lea.sflag [#allocation3], %s1308
          %s1310 = sand.u32 %s314, 1
          %s1311 = smul.addr %s1310, 8
          %s1312 = scalar_lea.vmem [#allocation2], %s1311
          %1313 = dma.done %s1309, 128
        $region84: #{tpu_custom_call.1} parent=79 // pred_fallthru
          _
      $region80: #{tpu_custom_call.1} parent=5 // pred_fallthru
        _
    $region6: #{tpu_custom_call.1} parent=1 // loop_footer
      %s26 = sadd.s32 1, %s22
    $region7: #{tpu_custom_call.1} parent=1 // loop_footer_branch
      %21 = sbr.rel target = $region3
    $region8: #{tpu_custom_call.1} parent=1 // loop_exit
      _
    %1314 = vsyncpa [#allocation3], 1
    %s1315 = scalar_lea.sflag [#allocation3], 1
    %1316 = vsyncpa %s1315, 1

</llo_original>
